<compile_context>
chip_gen: v7x
topology: tpu7x:2x2x1
jax: 0.10.0
libtpu: 0.0.40
codegen_flags: <defaults>
</compile_context>

<pallas_src>
import functools

import jax
import jax.numpy as jnp
from jax import lax
from jax.experimental import pallas as pl
from jax.experimental.pallas import tpu as pltpu

_LANES = 128        # TPU lane width
_PAIR_ROWS = 128    # pair rows per output-transpose group (keeps transposes aligned)


def _round_up(n, m):
    return ((n + m - 1) // m) * m


def _pick_batch_tile(b_pad, cap):
    """Largest multiple of 128 that divides b_pad, is <= cap and (when possible)
    leaves at least two grid steps (megacore sharding on v7x)."""
    m = b_pad // _LANES
    best = 1
    for d in range(1, m + 1):
        if m % d:
            continue
        if _LANES * d > cap:
            continue
        if m >= 2 and m // d < 2:
            continue
        best = d
    return _LANES * best


def _sublane_sum(v):
    """Sum a (d, chunk) value over sublanes -> (1, chunk); VPU fold before XLU."""
    d = v.shape[0]
    while d > 8 and d % 16 == 0:
        v = v[: d // 2] + v[d // 2:]
        d //= 2
    return jnp.sum(v, axis=0, keepdims=True)


def _ipn_kernel(x_ref, o_ref, acc_ref, *, num_fields, embed_dim, lane_chunk):
    F, D = num_fields, embed_dim
    FD = F * D
    FD_pad = _round_up(FD, _LANES)
    num_pairs = F * (F - 1) // 2
    pairs = [(i, j) for i in range(F - 1) for j in range(i + 1, F)]
    n_chunks = x_ref.shape[0] // lane_chunk

    def chunk_body(c, carry):
        row0 = pl.multiple_of(c * lane_chunk, lane_chunk)

        # ---- batch -> lanes relayout (in-kernel, aligned 128-col transposes) ----
        xc = x_ref[pl.ds(row0, lane_chunk), :].astype(jnp.float32)     # (chunk, FD)
        if FD_pad != FD:
            xc = jnp.concatenate(
                [xc, jnp.zeros((lane_chunk, FD_pad - FD), jnp.float32)], axis=1)
        pieces = [xc[:, k * _LANES:(k + 1) * _LANES].T                 # (128, chunk)
                  for k in range(FD_pad // _LANES)]
        xt = pieces[0] if len(pieces) == 1 else jnp.concatenate(pieces, axis=0)
        fields = [xt[i * D:(i + 1) * D, :] for i in range(F)]          # (D, chunk)

        # ---- all pairwise inner products for this chunk ----
        for g0 in range(0, num_pairs, _PAIR_ROWS):
            gsize = min(_PAIR_ROWS, num_pairs - g0)
            for k, (i, j) in enumerate(pairs[g0:g0 + gsize]):
                acc_ref[k:k + 1, :] = _sublane_sum(fields[i] * fields[j])
            # pairs -> lanes so the store is already in (batch, num_pairs) layout
            t = acc_ref[...].T                                         # (chunk, 128)
            o_ref[pl.ds(row0, lane_chunk), g0:g0 + gsize] = (
                t[:, :gsize].astype(o_ref.dtype))
        return carry

    lax.fori_loop(0, n_chunks, chunk_body, 0)


def inner_product_network_loop(x, *, batch_tile_cap=8192):
    """Pallas TPU implementation of InnerProductNetworkLoop.forward."""
    B, F, D = x.shape
    num_pairs = F * (F - 1) // 2
    if num_pairs == 0:
        return jnp.zeros((B, 0), dtype=x.dtype)
    FD = F * D

    # Native layout; this reshape is free (contiguous minor-dim merge).
    x2 = x.reshape(B, FD)
    b_pad = _round_up(B, _LANES)
    if b_pad != B:
        x2 = jnp.pad(x2, ((0, b_pad - B), (0, 0)))

    tb = _pick_batch_tile(b_pad, max(_LANES, batch_tile_cap))
    grid = (b_pad // tb,)

    itemsize = jnp.dtype(x.dtype).itemsize
    # VMEM footprint of the (double-buffered) blocks, with lane padding to 128.
    in_block_vmem = tb * _round_up(FD, _LANES) * itemsize
    out_block_vmem = tb * _round_up(num_pairs, _LANES) * itemsize
    vmem_bytes = 2 * in_block_vmem + 2 * out_block_vmem + (8 << 20)

    kernel = functools.partial(
        _ipn_kernel, num_fields=F, embed_dim=D, lane_chunk=_LANES)

    out = pl.pallas_call(
        kernel,
        out_shape=jax.ShapeDtypeStruct((b_pad, num_pairs), x.dtype),
        grid_spec=pltpu.PrefetchScalarGridSpec(
            num_scalar_prefetch=0,
            grid=grid,
            in_specs=[pl.BlockSpec((tb, FD), lambda b: (b, 0))],
            out_specs=pl.BlockSpec((tb, num_pairs), lambda b: (b, 0)),
            scratch_shapes=[pltpu.VMEM((_PAIR_ROWS, _LANES), jnp.float32)],
        ),
        compiler_params=pltpu.CompilerParams(
            dimension_semantics=("parallel",),
            vmem_limit_bytes=vmem_bytes,
        ),
        cost_estimate=pl.CostEstimate(
            flops=2 * B * num_pairs * D,
            transcendentals=0,
            bytes_accessed=B * (FD + num_pairs) * itemsize,
        ),
    )(x2)

    if b_pad != B:
        out = out[:B]
    return out


def _reference(x):
    # Pure-JAX reference mirroring the PyTorch loop exactly.
    B, F, D = x.shape
    row, col = [], []
    for i in range(F - 1):
        for j in range(i + 1, F):
            row.append(i)
            col.append(j)
    return jnp.sum(x[:, jnp.array(row)] * x[:, jnp.array(col)], axis=2)


if __name__ == "__main__":
    num_fields, embed_dim = 10, 16
    num_pairs = num_fields * (num_fields - 1) // 2
    key = jax.random.PRNGKey(0)
    k1, k2 = jax.random.split(key)

    # Case 1: batch = 256 -> two 128-row grid steps (pipelined / megacore path).
    x1 = jax.random.normal(k1, (256, num_fields, embed_dim), dtype=jnp.float32)
    out1 = jax.block_until_ready(inner_product_network_loop(x1))
    assert out1.shape == (256, num_pairs)
    assert jnp.allclose(out1, _reference(x1), atol=1e-5, rtol=1e-5), "mismatch (case 1)"

    # Case 2: batch = 40 (not a multiple of 128) -> padded single-step path.
    x2 = jax.random.normal(k2, (40, num_fields, embed_dim), dtype=jnp.float32)
    out2 = jax.block_until_ready(inner_product_network_loop(x2))
    assert out2.shape == (40, num_pairs)
    assert jnp.allclose(out2, _reference(x2), atol=1e-5, rtol=1e-5), "mismatch (case 2)"

    print("KERNEL_OK")
</pallas_src>

<mosaic_0001>
module attributes {stable_mosaic.version = 11 : i64} {
  func.func @_ipn_kernel(%arg0: i32, %arg1: memref<128x160xf32, #tpu.memory_space<vmem>>, %arg2: memref<128x45xf32, #tpu.memory_space<vmem>>, %arg3: memref<128x128xf32, #tpu.memory_space<vmem>>) attributes {dimension_semantics = [#tpu.dimension_semantics<parallel>], iteration_bounds = array<i64: 2>, scalar_prefetch = 0 : i64, scratch_operands = 1 : i64, tpu.core_type = #tpu.core_type<tc>, window_params = [{transform_indices = @transform_0, window_bounds = array<i64: 128, 160>}, {transform_indices = @transform_1, window_bounds = array<i64: 128, 45>}]} {
    %c0_i32 = arith.constant 0 : i32
    %c128_i32 = arith.constant 128 : i32
    %0 = arith.muli %c0_i32, %c128_i32 : i32
    %1 = tpu.assume_multiple %0, 128 : i32
    %2 = arith.index_cast %1 : i32 to index
    %c0 = arith.constant 0 : index
    %3 = vector.load %arg1[%2, %c0] : memref<128x160xf32, #tpu.memory_space<vmem>>, vector<128x160xf32>
    %cst = arith.constant 0.000000e+00 : f32
    %4 = vector.broadcast %cst : f32 to vector<128x96xf32>
    %5 = tpu.concatenate %3, %4 in 1 : vector<128x160xf32>, vector<128x96xf32> -> vector<128x256xf32>
    %6 = vector.extract_strided_slice %5 {offsets = [0, 0], sizes = [128, 128], strides = [1, 1]} : vector<128x256xf32> to vector<128x128xf32>
    %7 = tpu.transpose %6, [1, 0] : vector<128x128xf32> -> vector<128x128xf32>
    %8 = vector.extract_strided_slice %5 {offsets = [0, 128], sizes = [128, 128], strides = [1, 1]} : vector<128x256xf32> to vector<128x128xf32>
    %9 = tpu.transpose %8, [1, 0] : vector<128x128xf32> -> vector<128x128xf32>
    %10 = tpu.concatenate %7, %9 in 0 : vector<128x128xf32>, vector<128x128xf32> -> vector<256x128xf32>
    %11 = vector.extract_strided_slice %10 {offsets = [0, 0], sizes = [16, 128], strides = [1, 1]} : vector<256x128xf32> to vector<16x128xf32>
    %12 = vector.extract_strided_slice %10 {offsets = [16, 0], sizes = [16, 128], strides = [1, 1]} : vector<256x128xf32> to vector<16x128xf32>
    %13 = vector.extract_strided_slice %10 {offsets = [32, 0], sizes = [16, 128], strides = [1, 1]} : vector<256x128xf32> to vector<16x128xf32>
    %14 = vector.extract_strided_slice %10 {offsets = [48, 0], sizes = [16, 128], strides = [1, 1]} : vector<256x128xf32> to vector<16x128xf32>
    %15 = vector.extract_strided_slice %10 {offsets = [64, 0], sizes = [16, 128], strides = [1, 1]} : vector<256x128xf32> to vector<16x128xf32>
    %16 = vector.extract_strided_slice %10 {offsets = [80, 0], sizes = [16, 128], strides = [1, 1]} : vector<256x128xf32> to vector<16x128xf32>
    %17 = vector.extract_strided_slice %10 {offsets = [96, 0], sizes = [16, 128], strides = [1, 1]} : vector<256x128xf32> to vector<16x128xf32>
    %18 = vector.extract_strided_slice %10 {offsets = [112, 0], sizes = [16, 128], strides = [1, 1]} : vector<256x128xf32> to vector<16x128xf32>
    %19 = vector.extract_strided_slice %10 {offsets = [128, 0], sizes = [16, 128], strides = [1, 1]} : vector<256x128xf32> to vector<16x128xf32>
    %20 = vector.extract_strided_slice %10 {offsets = [144, 0], sizes = [16, 128], strides = [1, 1]} : vector<256x128xf32> to vector<16x128xf32>
    %21 = arith.mulf %11, %12 : vector<16x128xf32>
    %22 = vector.extract_strided_slice %21 {offsets = [0, 0], sizes = [8, 128], strides = [1, 1]} : vector<16x128xf32> to vector<8x128xf32>
    %23 = vector.extract_strided_slice %21 {offsets = [8, 0], sizes = [8, 128], strides = [1, 1]} : vector<16x128xf32> to vector<8x128xf32>
    %24 = arith.addf %22, %23 : vector<8x128xf32>
    %cst_0 = arith.constant dense<0.000000e+00> : vector<128xf32>
    %25 = vector.multi_reduction <add>, %24, %cst_0 [0] : vector<8x128xf32> to vector<128xf32>
    %26 = vector.shape_cast %25 : vector<128xf32> to vector<1x128xf32>
    %c0_1 = arith.constant 0 : index
    %c0_2 = arith.constant 0 : index
    %27 = vector.load %arg3[%c0_1, %c0_2] : memref<128x128xf32, #tpu.memory_space<vmem>>, vector<1x128xf32>
    tpu.vector_store %arg3[%c0_1, %c0_2], %26 {strides = array<i32>} : memref<128x128xf32, #tpu.memory_space<vmem>>, vector<1x128xf32>,
    %28 = arith.mulf %11, %13 : vector<16x128xf32>
    %29 = vector.extract_strided_slice %28 {offsets = [0, 0], sizes = [8, 128], strides = [1, 1]} : vector<16x128xf32> to vector<8x128xf32>
    %30 = vector.extract_strided_slice %28 {offsets = [8, 0], sizes = [8, 128], strides = [1, 1]} : vector<16x128xf32> to vector<8x128xf32>
    %31 = arith.addf %29, %30 : vector<8x128xf32>
    %cst_3 = arith.constant dense<0.000000e+00> : vector<128xf32>
    %32 = vector.multi_reduction <add>, %31, %cst_3 [0] : vector<8x128xf32> to vector<128xf32>
    %33 = vector.shape_cast %32 : vector<128xf32> to vector<1x128xf32>
    %c1 = arith.constant 1 : index
    %c0_4 = arith.constant 0 : index
    %34 = vector.load %arg3[%c1, %c0_4] : memref<128x128xf32, #tpu.memory_space<vmem>>, vector<1x128xf32>
    tpu.vector_store %arg3[%c1, %c0_4], %33 {strides = array<i32>} : memref<128x128xf32, #tpu.memory_space<vmem>>, vector<1x128xf32>,
    %35 = arith.mulf %11, %14 : vector<16x128xf32>
    %36 = vector.extract_strided_slice %35 {offsets = [0, 0], sizes = [8, 128], strides = [1, 1]} : vector<16x128xf32> to vector<8x128xf32>
    %37 = vector.extract_strided_slice %35 {offsets = [8, 0], sizes = [8, 128], strides = [1, 1]} : vector<16x128xf32> to vector<8x128xf32>
    %38 = arith.addf %36, %37 : vector<8x128xf32>
    %cst_5 = arith.constant dense<0.000000e+00> : vector<128xf32>
    %39 = vector.multi_reduction <add>, %38, %cst_5 [0] : vector<8x128xf32> to vector<128xf32>
    %40 = vector.shape_cast %39 : vector<128xf32> to vector<1x128xf32>
    %c2 = arith.constant 2 : index
    %c0_6 = arith.constant 0 : index
    %41 = vector.load %arg3[%c2, %c0_6] : memref<128x128xf32, #tpu.memory_space<vmem>>, vector<1x128xf32>
    tpu.vector_store %arg3[%c2, %c0_6], %40 {strides = array<i32>} : memref<128x128xf32, #tpu.memory_space<vmem>>, vector<1x128xf32>,
    %42 = arith.mulf %11, %15 : vector<16x128xf32>
    %43 = vector.extract_strided_slice %42 {offsets = [0, 0], sizes = [8, 128], strides = [1, 1]} : vector<16x128xf32> to vector<8x128xf32>
    %44 = vector.extract_strided_slice %42 {offsets = [8, 0], sizes = [8, 128], strides = [1, 1]} : vector<16x128xf32> to vector<8x128xf32>
    %45 = arith.addf %43, %44 : vector<8x128xf32>
    %cst_7 = arith.constant dense<0.000000e+00> : vector<128xf32>
    %46 = vector.multi_reduction <add>, %45, %cst_7 [0] : vector<8x128xf32> to vector<128xf32>
    %47 = vector.shape_cast %46 : vector<128xf32> to vector<1x128xf32>
    %c3 = arith.constant 3 : index
    %c0_8 = arith.constant 0 : index
    %48 = vector.load %arg3[%c3, %c0_8] : memref<128x128xf32, #tpu.memory_space<vmem>>, vector<1x128xf32>
    tpu.vector_store %arg3[%c3, %c0_8], %47 {strides = array<i32>} : memref<128x128xf32, #tpu.memory_space<vmem>>, vector<1x128xf32>,
    %49 = arith.mulf %11, %16 : vector<16x128xf32>
    %50 = vector.extract_strided_slice %49 {offsets = [0, 0], sizes = [8, 128], strides = [1, 1]} : vector<16x128xf32> to vector<8x128xf32>
    %51 = vector.extract_strided_slice %49 {offsets = [8, 0], sizes = [8, 128], strides = [1, 1]} : vector<16x128xf32> to vector<8x128xf32>
    %52 = arith.addf %50, %51 : vector<8x128xf32>
    %cst_9 = arith.constant dense<0.000000e+00> : vector<128xf32>
    %53 = vector.multi_reduction <add>, %52, %cst_9 [0] : vector<8x128xf32> to vector<128xf32>
    %54 = vector.shape_cast %53 : vector<128xf32> to vector<1x128xf32>
    %c4 = arith.constant 4 : index
    %c0_10 = arith.constant 0 : index
    %55 = vector.load %arg3[%c4, %c0_10] : memref<128x128xf32, #tpu.memory_space<vmem>>, vector<1x128xf32>
    tpu.vector_store %arg3[%c4, %c0_10], %54 {strides = array<i32>} : memref<128x128xf32, #tpu.memory_space<vmem>>, vector<1x128xf32>,
    %56 = arith.mulf %11, %17 : vector<16x128xf32>
    %57 = vector.extract_strided_slice %56 {offsets = [0, 0], sizes = [8, 128], strides = [1, 1]} : vector<16x128xf32> to vector<8x128xf32>
    %58 = vector.extract_strided_slice %56 {offsets = [8, 0], sizes = [8, 128], strides = [1, 1]} : vector<16x128xf32> to vector<8x128xf32>
    %59 = arith.addf %57, %58 : vector<8x128xf32>
    %cst_11 = arith.constant dense<0.000000e+00> : vector<128xf32>
    %60 = vector.multi_reduction <add>, %59, %cst_11 [0] : vector<8x128xf32> to vector<128xf32>
    %61 = vector.shape_cast %60 : vector<128xf32> to vector<1x128xf32>
    %c5 = arith.constant 5 : index
    %c0_12 = arith.constant 0 : index
    %62 = vector.load %arg3[%c5, %c0_12] : memref<128x128xf32, #tpu.memory_space<vmem>>, vector<1x128xf32>
    tpu.vector_store %arg3[%c5, %c0_12], %61 {strides = array<i32>} : memref<128x128xf32, #tpu.memory_space<vmem>>, vector<1x128xf32>,
    %63 = arith.mulf %11, %18 : vector<16x128xf32>
    %64 = vector.extract_strided_slice %63 {offsets = [0, 0], sizes = [8, 128], strides = [1, 1]} : vector<16x128xf32> to vector<8x128xf32>
    %65 = vector.extract_strided_slice %63 {offsets = [8, 0], sizes = [8, 128], strides = [1, 1]} : vector<16x128xf32> to vector<8x128xf32>
    %66 = arith.addf %64, %65 : vector<8x128xf32>
    %cst_13 = arith.constant dense<0.000000e+00> : vector<128xf32>
    %67 = vector.multi_reduction <add>, %66, %cst_13 [0] : vector<8x128xf32> to vector<128xf32>
    %68 = vector.shape_cast %67 : vector<128xf32> to vector<1x128xf32>
    %c6 = arith.constant 6 : index
    %c0_14 = arith.constant 0 : index
    %69 = vector.load %arg3[%c6, %c0_14] : memref<128x128xf32, #tpu.memory_space<vmem>>, vector<1x128xf32>
    tpu.vector_store %arg3[%c6, %c0_14], %68 {strides = array<i32>} : memref<128x128xf32, #tpu.memory_space<vmem>>, vector<1x128xf32>,
    %70 = arith.mulf %11, %19 : vector<16x128xf32>
    %71 = vector.extract_strided_slice %70 {offsets = [0, 0], sizes = [8, 128], strides = [1, 1]} : vector<16x128xf32> to vector<8x128xf32>
    %72 = vector.extract_strided_slice %70 {offsets = [8, 0], sizes = [8, 128], strides = [1, 1]} : vector<16x128xf32> to vector<8x128xf32>
    %73 = arith.addf %71, %72 : vector<8x128xf32>
    %cst_15 = arith.constant dense<0.000000e+00> : vector<128xf32>
    %74 = vector.multi_reduction <add>, %73, %cst_15 [0] : vector<8x128xf32> to vector<128xf32>
    %75 = vector.shape_cast %74 : vector<128xf32> to vector<1x128xf32>
    %c7 = arith.constant 7 : index
    %c0_16 = arith.constant 0 : index
    %76 = vector.load %arg3[%c7, %c0_16] : memref<128x128xf32, #tpu.memory_space<vmem>>, vector<1x128xf32>
    tpu.vector_store %arg3[%c7, %c0_16], %75 {strides = array<i32>} : memref<128x128xf32, #tpu.memory_space<vmem>>, vector<1x128xf32>,
    %77 = arith.mulf %11, %20 : vector<16x128xf32>
    %78 = vector.extract_strided_slice %77 {offsets = [0, 0], sizes = [8, 128], strides = [1, 1]} : vector<16x128xf32> to vector<8x128xf32>
    %79 = vector.extract_strided_slice %77 {offsets = [8, 0], sizes = [8, 128], strides = [1, 1]} : vector<16x128xf32> to vector<8x128xf32>
    %80 = arith.addf %78, %79 : vector<8x128xf32>
    %cst_17 = arith.constant dense<0.000000e+00> : vector<128xf32>
    %81 = vector.multi_reduction <add>, %80, %cst_17 [0] : vector<8x128xf32> to vector<128xf32>
    %82 = vector.shape_cast %81 : vector<128xf32> to vector<1x128xf32>
    %c8 = arith.constant 8 : index
    %c0_18 = arith.constant 0 : index
    %83 = vector.load %arg3[%c8, %c0_18] : memref<128x128xf32, #tpu.memory_space<vmem>>, vector<1x128xf32>
    tpu.vector_store %arg3[%c8, %c0_18], %82 {strides = array<i32>} : memref<128x128xf32, #tpu.memory_space<vmem>>, vector<1x128xf32>,
    %84 = arith.mulf %12, %13 : vector<16x128xf32>
    %85 = vector.extract_strided_slice %84 {offsets = [0, 0], sizes = [8, 128], strides = [1, 1]} : vector<16x128xf32> to vector<8x128xf32>
    %86 = vector.extract_strided_slice %84 {offsets = [8, 0], sizes = [8, 128], strides = [1, 1]} : vector<16x128xf32> to vector<8x128xf32>
    %87 = arith.addf %85, %86 : vector<8x128xf32>
    %cst_19 = arith.constant dense<0.000000e+00> : vector<128xf32>
    %88 = vector.multi_reduction <add>, %87, %cst_19 [0] : vector<8x128xf32> to vector<128xf32>
    %89 = vector.shape_cast %88 : vector<128xf32> to vector<1x128xf32>
    %c9 = arith.constant 9 : index
    %c0_20 = arith.constant 0 : index
    %90 = vector.load %arg3[%c9, %c0_20] : memref<128x128xf32, #tpu.memory_space<vmem>>, vector<1x128xf32>
    tpu.vector_store %arg3[%c9, %c0_20], %89 {strides = array<i32>} : memref<128x128xf32, #tpu.memory_space<vmem>>, vector<1x128xf32>,
    %91 = arith.mulf %12, %14 : vector<16x128xf32>
    %92 = vector.extract_strided_slice %91 {offsets = [0, 0], sizes = [8, 128], strides = [1, 1]} : vector<16x128xf32> to vector<8x128xf32>
    %93 = vector.extract_strided_slice %91 {offsets = [8, 0], sizes = [8, 128], strides = [1, 1]} : vector<16x128xf32> to vector<8x128xf32>
    %94 = arith.addf %92, %93 : vector<8x128xf32>
    %cst_21 = arith.constant dense<0.000000e+00> : vector<128xf32>
    %95 = vector.multi_reduction <add>, %94, %cst_21 [0] : vector<8x128xf32> to vector<128xf32>
    %96 = vector.shape_cast %95 : vector<128xf32> to vector<1x128xf32>
    %c10 = arith.constant 10 : index
    %c0_22 = arith.constant 0 : index
    %97 = vector.load %arg3[%c10, %c0_22] : memref<128x128xf32, #tpu.memory_space<vmem>>, vector<1x128xf32>
    tpu.vector_store %arg3[%c10, %c0_22], %96 {strides = array<i32>} : memref<128x128xf32, #tpu.memory_space<vmem>>, vector<1x128xf32>,
    %98 = arith.mulf %12, %15 : vector<16x128xf32>
    %99 = vector.extract_strided_slice %98 {offsets = [0, 0], sizes = [8, 128], strides = [1, 1]} : vector<16x128xf32> to vector<8x128xf32>
    %100 = vector.extract_strided_slice %98 {offsets = [8, 0], sizes = [8, 128], strides = [1, 1]} : vector<16x128xf32> to vector<8x128xf32>
    %101 = arith.addf %99, %100 : vector<8x128xf32>
    %cst_23 = arith.constant dense<0.000000e+00> : vector<128xf32>
    %102 = vector.multi_reduction <add>, %101, %cst_23 [0] : vector<8x128xf32> to vector<128xf32>
    %103 = vector.shape_cast %102 : vector<128xf32> to vector<1x128xf32>
    %c11 = arith.constant 11 : index
    %c0_24 = arith.constant 0 : index
    %104 = vector.load %arg3[%c11, %c0_24] : memref<128x128xf32, #tpu.memory_space<vmem>>, vector<1x128xf32>
    tpu.vector_store %arg3[%c11, %c0_24], %103 {strides = array<i32>} : memref<128x128xf32, #tpu.memory_space<vmem>>, vector<1x128xf32>,
    %105 = arith.mulf %12, %16 : vector<16x128xf32>
    %106 = vector.extract_strided_slice %105 {offsets = [0, 0], sizes = [8, 128], strides = [1, 1]} : vector<16x128xf32> to vector<8x128xf32>
    %107 = vector.extract_strided_slice %105 {offsets = [8, 0], sizes = [8, 128], strides = [1, 1]} : vector<16x128xf32> to vector<8x128xf32>
    %108 = arith.addf %106, %107 : vector<8x128xf32>
    %cst_25 = arith.constant dense<0.000000e+00> : vector<128xf32>
    %109 = vector.multi_reduction <add>, %108, %cst_25 [0] : vector<8x128xf32> to vector<128xf32>
    %110 = vector.shape_cast %109 : vector<128xf32> to vector<1x128xf32>
    %c12 = arith.constant 12 : index
    %c0_26 = arith.constant 0 : index
    %111 = vector.load %arg3[%c12, %c0_26] : memref<128x128xf32, #tpu.memory_space<vmem>>, vector<1x128xf32>
    tpu.vector_store %arg3[%c12, %c0_26], %110 {strides = array<i32>} : memref<128x128xf32, #tpu.memory_space<vmem>>, vector<1x128xf32>,
    %112 = arith.mulf %12, %17 : vector<16x128xf32>
    %113 = vector.extract_strided_slice %112 {offsets = [0, 0], sizes = [8, 128], strides = [1, 1]} : vector<16x128xf32> to vector<8x128xf32>
    %114 = vector.extract_strided_slice %112 {offsets = [8, 0], sizes = [8, 128], strides = [1, 1]} : vector<16x128xf32> to vector<8x128xf32>
    %115 = arith.addf %113, %114 : vector<8x128xf32>
    %cst_27 = arith.constant dense<0.000000e+00> : vector<128xf32>
    %116 = vector.multi_reduction <add>, %115, %cst_27 [0] : vector<8x128xf32> to vector<128xf32>
    %117 = vector.shape_cast %116 : vector<128xf32> to vector<1x128xf32>
    %c13 = arith.constant 13 : index
    %c0_28 = arith.constant 0 : index
    %118 = vector.load %arg3[%c13, %c0_28] : memref<128x128xf32, #tpu.memory_space<vmem>>, vector<1x128xf32>
    tpu.vector_store %arg3[%c13, %c0_28], %117 {strides = array<i32>} : memref<128x128xf32, #tpu.memory_space<vmem>>, vector<1x128xf32>,
    %119 = arith.mulf %12, %18 : vector<16x128xf32>
    %120 = vector.extract_strided_slice %119 {offsets = [0, 0], sizes = [8, 128], strides = [1, 1]} : vector<16x128xf32> to vector<8x128xf32>
    %121 = vector.extract_strided_slice %119 {offsets = [8, 0], sizes = [8, 128], strides = [1, 1]} : vector<16x128xf32> to vector<8x128xf32>
    %122 = arith.addf %120, %121 : vector<8x128xf32>
    %cst_29 = arith.constant dense<0.000000e+00> : vector<128xf32>
    %123 = vector.multi_reduction <add>, %122, %cst_29 [0] : vector<8x128xf32> to vector<128xf32>
    %124 = vector.shape_cast %123 : vector<128xf32> to vector<1x128xf32>
    %c14 = arith.constant 14 : index
    %c0_30 = arith.constant 0 : index
    %125 = vector.load %arg3[%c14, %c0_30] : memref<128x128xf32, #tpu.memory_space<vmem>>, vector<1x128xf32>
    tpu.vector_store %arg3[%c14, %c0_30], %124 {strides = array<i32>} : memref<128x128xf32, #tpu.memory_space<vmem>>, vector<1x128xf32>,
    %126 = arith.mulf %12, %19 : vector<16x128xf32>
    %127 = vector.extract_strided_slice %126 {offsets = [0, 0], sizes = [8, 128], strides = [1, 1]} : vector<16x128xf32> to vector<8x128xf32>
    %128 = vector.extract_strided_slice %126 {offsets = [8, 0], sizes = [8, 128], strides = [1, 1]} : vector<16x128xf32> to vector<8x128xf32>
    %129 = arith.addf %127, %128 : vector<8x128xf32>
    %cst_31 = arith.constant dense<0.000000e+00> : vector<128xf32>
    %130 = vector.multi_reduction <add>, %129, %cst_31 [0] : vector<8x128xf32> to vector<128xf32>
    %131 = vector.shape_cast %130 : vector<128xf32> to vector<1x128xf32>
    %c15 = arith.constant 15 : index
    %c0_32 = arith.constant 0 : index
    %132 = vector.load %arg3[%c15, %c0_32] : memref<128x128xf32, #tpu.memory_space<vmem>>, vector<1x128xf32>
    tpu.vector_store %arg3[%c15, %c0_32], %131 {strides = array<i32>} : memref<128x128xf32, #tpu.memory_space<vmem>>, vector<1x128xf32>,
    %133 = arith.mulf %12, %20 : vector<16x128xf32>
    %134 = vector.extract_strided_slice %133 {offsets = [0, 0], sizes = [8, 128], strides = [1, 1]} : vector<16x128xf32> to vector<8x128xf32>
    %135 = vector.extract_strided_slice %133 {offsets = [8, 0], sizes = [8, 128], strides = [1, 1]} : vector<16x128xf32> to vector<8x128xf32>
    %136 = arith.addf %134, %135 : vector<8x128xf32>
    %cst_33 = arith.constant dense<0.000000e+00> : vector<128xf32>
    %137 = vector.multi_reduction <add>, %136, %cst_33 [0] : vector<8x128xf32> to vector<128xf32>
    %138 = vector.shape_cast %137 : vector<128xf32> to vector<1x128xf32>
    %c16 = arith.constant 16 : index
    %c0_34 = arith.constant 0 : index
    %139 = vector.load %arg3[%c16, %c0_34] : memref<128x128xf32, #tpu.memory_space<vmem>>, vector<1x128xf32>
    tpu.vector_store %arg3[%c16, %c0_34], %138 {strides = array<i32>} : memref<128x128xf32, #tpu.memory_space<vmem>>, vector<1x128xf32>,
    %140 = arith.mulf %13, %14 : vector<16x128xf32>
    %141 = vector.extract_strided_slice %140 {offsets = [0, 0], sizes = [8, 128], strides = [1, 1]} : vector<16x128xf32> to vector<8x128xf32>
    %142 = vector.extract_strided_slice %140 {offsets = [8, 0], sizes = [8, 128], strides = [1, 1]} : vector<16x128xf32> to vector<8x128xf32>
    %143 = arith.addf %141, %142 : vector<8x128xf32>
    %cst_35 = arith.constant dense<0.000000e+00> : vector<128xf32>
    %144 = vector.multi_reduction <add>, %143, %cst_35 [0] : vector<8x128xf32> to vector<128xf32>
    %145 = vector.shape_cast %144 : vector<128xf32> to vector<1x128xf32>
    %c17 = arith.constant 17 : index
    %c0_36 = arith.constant 0 : index
    %146 = vector.load %arg3[%c17, %c0_36] : memref<128x128xf32, #tpu.memory_space<vmem>>, vector<1x128xf32>
    tpu.vector_store %arg3[%c17, %c0_36], %145 {strides = array<i32>} : memref<128x128xf32, #tpu.memory_space<vmem>>, vector<1x128xf32>,
    %147 = arith.mulf %13, %15 : vector<16x128xf32>
    %148 = vector.extract_strided_slice %147 {offsets = [0, 0], sizes = [8, 128], strides = [1, 1]} : vector<16x128xf32> to vector<8x128xf32>
    %149 = vector.extract_strided_slice %147 {offsets = [8, 0], sizes = [8, 128], strides = [1, 1]} : vector<16x128xf32> to vector<8x128xf32>
    %150 = arith.addf %148, %149 : vector<8x128xf32>
    %cst_37 = arith.constant dense<0.000000e+00> : vector<128xf32>
    %151 = vector.multi_reduction <add>, %150, %cst_37 [0] : vector<8x128xf32> to vector<128xf32>
    %152 = vector.shape_cast %151 : vector<128xf32> to vector<1x128xf32>
    %c18 = arith.constant 18 : index
    %c0_38 = arith.constant 0 : index
    %153 = vector.load %arg3[%c18, %c0_38] : memref<128x128xf32, #tpu.memory_space<vmem>>, vector<1x128xf32>
    tpu.vector_store %arg3[%c18, %c0_38], %152 {strides = array<i32>} : memref<128x128xf32, #tpu.memory_space<vmem>>, vector<1x128xf32>,
    %154 = arith.mulf %13, %16 : vector<16x128xf32>
    %155 = vector.extract_strided_slice %154 {offsets = [0, 0], sizes = [8, 128], strides = [1, 1]} : vector<16x128xf32> to vector<8x128xf32>
    %156 = vector.extract_strided_slice %154 {offsets = [8, 0], sizes = [8, 128], strides = [1, 1]} : vector<16x128xf32> to vector<8x128xf32>
    %157 = arith.addf %155, %156 : vector<8x128xf32>
    %cst_39 = arith.constant dense<0.000000e+00> : vector<128xf32>
    %158 = vector.multi_reduction <add>, %157, %cst_39 [0] : vector<8x128xf32> to vector<128xf32>
    %159 = vector.shape_cast %158 : vector<128xf32> to vector<1x128xf32>
    %c19 = arith.constant 19 : index
    %c0_40 = arith.constant 0 : index
    %160 = vector.load %arg3[%c19, %c0_40] : memref<128x128xf32, #tpu.memory_space<vmem>>, vector<1x128xf32>
    tpu.vector_store %arg3[%c19, %c0_40], %159 {strides = array<i32>} : memref<128x128xf32, #tpu.memory_space<vmem>>, vector<1x128xf32>,
    %161 = arith.mulf %13, %17 : vector<16x128xf32>
    %162 = vector.extract_strided_slice %161 {offsets = [0, 0], sizes = [8, 128], strides = [1, 1]} : vector<16x128xf32> to vector<8x128xf32>
    %163 = vector.extract_strided_slice %161 {offsets = [8, 0], sizes = [8, 128], strides = [1, 1]} : vector<16x128xf32> to vector<8x128xf32>
    %164 = arith.addf %162, %163 : vector<8x128xf32>
    %cst_41 = arith.constant dense<0.000000e+00> : vector<128xf32>
    %165 = vector.multi_reduction <add>, %164, %cst_41 [0] : vector<8x128xf32> to vector<128xf32>
    %166 = vector.shape_cast %165 : vector<128xf32> to vector<1x128xf32>
    %c20 = arith.constant 20 : index
    %c0_42 = arith.constant 0 : index
    %167 = vector.load %arg3[%c20, %c0_42] : memref<128x128xf32, #tpu.memory_space<vmem>>, vector<1x128xf32>
    tpu.vector_store %arg3[%c20, %c0_42], %166 {strides = array<i32>} : memref<128x128xf32, #tpu.memory_space<vmem>>, vector<1x128xf32>,
    %168 = arith.mulf %13, %18 : vector<16x128xf32>
    %169 = vector.extract_strided_slice %168 {offsets = [0, 0], sizes = [8, 128], strides = [1, 1]} : vector<16x128xf32> to vector<8x128xf32>
    %170 = vector.extract_strided_slice %168 {offsets = [8, 0], sizes = [8, 128], strides = [1, 1]} : vector<16x128xf32> to vector<8x128xf32>
    %171 = arith.addf %169, %170 : vector<8x128xf32>
    %cst_43 = arith.constant dense<0.000000e+00> : vector<128xf32>
    %172 = vector.multi_reduction <add>, %171, %cst_43 [0] : vector<8x128xf32> to vector<128xf32>
    %173 = vector.shape_cast %172 : vector<128xf32> to vector<1x128xf32>
    %c21 = arith.constant 21 : index
    %c0_44 = arith.constant 0 : index
    %174 = vector.load %arg3[%c21, %c0_44] : memref<128x128xf32, #tpu.memory_space<vmem>>, vector<1x128xf32>
    tpu.vector_store %arg3[%c21, %c0_44], %173 {strides = array<i32>} : memref<128x128xf32, #tpu.memory_space<vmem>>, vector<1x128xf32>,
    %175 = arith.mulf %13, %19 : vector<16x128xf32>
    %176 = vector.extract_strided_slice %175 {offsets = [0, 0], sizes = [8, 128], strides = [1, 1]} : vector<16x128xf32> to vector<8x128xf32>
    %177 = vector.extract_strided_slice %175 {offsets = [8, 0], sizes = [8, 128], strides = [1, 1]} : vector<16x128xf32> to vector<8x128xf32>
    %178 = arith.addf %176, %177 : vector<8x128xf32>
    %cst_45 = arith.constant dense<0.000000e+00> : vector<128xf32>
    %179 = vector.multi_reduction <add>, %178, %cst_45 [0] : vector<8x128xf32> to vector<128xf32>
    %180 = vector.shape_cast %179 : vector<128xf32> to vector<1x128xf32>
    %c22 = arith.constant 22 : index
    %c0_46 = arith.constant 0 : index
    %181 = vector.load %arg3[%c22, %c0_46] : memref<128x128xf32, #tpu.memory_space<vmem>>, vector<1x128xf32>
    tpu.vector_store %arg3[%c22, %c0_46], %180 {strides = array<i32>} : memref<128x128xf32, #tpu.memory_space<vmem>>, vector<1x128xf32>,
    %182 = arith.mulf %13, %20 : vector<16x128xf32>
    %183 = vector.extract_strided_slice %182 {offsets = [0, 0], sizes = [8, 128], strides = [1, 1]} : vector<16x128xf32> to vector<8x128xf32>
    %184 = vector.extract_strided_slice %182 {offsets = [8, 0], sizes = [8, 128], strides = [1, 1]} : vector<16x128xf32> to vector<8x128xf32>
    %185 = arith.addf %183, %184 : vector<8x128xf32>
    %cst_47 = arith.constant dense<0.000000e+00> : vector<128xf32>
    %186 = vector.multi_reduction <add>, %185, %cst_47 [0] : vector<8x128xf32> to vector<128xf32>
    %187 = vector.shape_cast %186 : vector<128xf32> to vector<1x128xf32>
    %c23 = arith.constant 23 : index
    %c0_48 = arith.constant 0 : index
    %188 = vector.load %arg3[%c23, %c0_48] : memref<128x128xf32, #tpu.memory_space<vmem>>, vector<1x128xf32>
    tpu.vector_store %arg3[%c23, %c0_48], %187 {strides = array<i32>} : memref<128x128xf32, #tpu.memory_space<vmem>>, vector<1x128xf32>,
    %189 = arith.mulf %14, %15 : vector<16x128xf32>
    %190 = vector.extract_strided_slice %189 {offsets = [0, 0], sizes = [8, 128], strides = [1, 1]} : vector<16x128xf32> to vector<8x128xf32>
    %191 = vector.extract_strided_slice %189 {offsets = [8, 0], sizes = [8, 128], strides = [1, 1]} : vector<16x128xf32> to vector<8x128xf32>
    %192 = arith.addf %190, %191 : vector<8x128xf32>
    %cst_49 = arith.constant dense<0.000000e+00> : vector<128xf32>
    %193 = vector.multi_reduction <add>, %192, %cst_49 [0] : vector<8x128xf32> to vector<128xf32>
    %194 = vector.shape_cast %193 : vector<128xf32> to vector<1x128xf32>
    %c24 = arith.constant 24 : index
    %c0_50 = arith.constant 0 : index
    %195 = vector.load %arg3[%c24, %c0_50] : memref<128x128xf32, #tpu.memory_space<vmem>>, vector<1x128xf32>
    tpu.vector_store %arg3[%c24, %c0_50], %194 {strides = array<i32>} : memref<128x128xf32, #tpu.memory_space<vmem>>, vector<1x128xf32>,
    %196 = arith.mulf %14, %16 : vector<16x128xf32>
    %197 = vector.extract_strided_slice %196 {offsets = [0, 0], sizes = [8, 128], strides = [1, 1]} : vector<16x128xf32> to vector<8x128xf32>
    %198 = vector.extract_strided_slice %196 {offsets = [8, 0], sizes = [8, 128], strides = [1, 1]} : vector<16x128xf32> to vector<8x128xf32>
    %199 = arith.addf %197, %198 : vector<8x128xf32>
    %cst_51 = arith.constant dense<0.000000e+00> : vector<128xf32>
    %200 = vector.multi_reduction <add>, %199, %cst_51 [0] : vector<8x128xf32> to vector<128xf32>
    %201 = vector.shape_cast %200 : vector<128xf32> to vector<1x128xf32>
    %c25 = arith.constant 25 : index
    %c0_52 = arith.constant 0 : index
    %202 = vector.load %arg3[%c25, %c0_52] : memref<128x128xf32, #tpu.memory_space<vmem>>, vector<1x128xf32>
    tpu.vector_store %arg3[%c25, %c0_52], %201 {strides = array<i32>} : memref<128x128xf32, #tpu.memory_space<vmem>>, vector<1x128xf32>,
    %203 = arith.mulf %14, %17 : vector<16x128xf32>
    %204 = vector.extract_strided_slice %203 {offsets = [0, 0], sizes = [8, 128], strides = [1, 1]} : vector<16x128xf32> to vector<8x128xf32>
    %205 = vector.extract_strided_slice %203 {offsets = [8, 0], sizes = [8, 128], strides = [1, 1]} : vector<16x128xf32> to vector<8x128xf32>
    %206 = arith.addf %204, %205 : vector<8x128xf32>
    %cst_53 = arith.constant dense<0.000000e+00> : vector<128xf32>
    %207 = vector.multi_reduction <add>, %206, %cst_53 [0] : vector<8x128xf32> to vector<128xf32>
    %208 = vector.shape_cast %207 : vector<128xf32> to vector<1x128xf32>
    %c26 = arith.constant 26 : index
    %c0_54 = arith.constant 0 : index
    %209 = vector.load %arg3[%c26, %c0_54] : memref<128x128xf32, #tpu.memory_space<vmem>>, vector<1x128xf32>
    tpu.vector_store %arg3[%c26, %c0_54], %208 {strides = array<i32>} : memref<128x128xf32, #tpu.memory_space<vmem>>, vector<1x128xf32>,
    %210 = arith.mulf %14, %18 : vector<16x128xf32>
    %211 = vector.extract_strided_slice %210 {offsets = [0, 0], sizes = [8, 128], strides = [1, 1]} : vector<16x128xf32> to vector<8x128xf32>
    %212 = vector.extract_strided_slice %210 {offsets = [8, 0], sizes = [8, 128], strides = [1, 1]} : vector<16x128xf32> to vector<8x128xf32>
    %213 = arith.addf %211, %212 : vector<8x128xf32>
    %cst_55 = arith.constant dense<0.000000e+00> : vector<128xf32>
    %214 = vector.multi_reduction <add>, %213, %cst_55 [0] : vector<8x128xf32> to vector<128xf32>
    %215 = vector.shape_cast %214 : vector<128xf32> to vector<1x128xf32>
    %c27 = arith.constant 27 : index
    %c0_56 = arith.constant 0 : index
    %216 = vector.load %arg3[%c27, %c0_56] : memref<128x128xf32, #tpu.memory_space<vmem>>, vector<1x128xf32>
    tpu.vector_store %arg3[%c27, %c0_56], %215 {strides = array<i32>} : memref<128x128xf32, #tpu.memory_space<vmem>>, vector<1x128xf32>,
    %217 = arith.mulf %14, %19 : vector<16x128xf32>
    %218 = vector.extract_strided_slice %217 {offsets = [0, 0], sizes = [8, 128], strides = [1, 1]} : vector<16x128xf32> to vector<8x128xf32>
    %219 = vector.extract_strided_slice %217 {offsets = [8, 0], sizes = [8, 128], strides = [1, 1]} : vector<16x128xf32> to vector<8x128xf32>
    %220 = arith.addf %218, %219 : vector<8x128xf32>
    %cst_57 = arith.constant dense<0.000000e+00> : vector<128xf32>
    %221 = vector.multi_reduction <add>, %220, %cst_57 [0] : vector<8x128xf32> to vector<128xf32>
    %222 = vector.shape_cast %221 : vector<128xf32> to vector<1x128xf32>
    %c28 = arith.constant 28 : index
    %c0_58 = arith.constant 0 : index
    %223 = vector.load %arg3[%c28, %c0_58] : memref<128x128xf32, #tpu.memory_space<vmem>>, vector<1x128xf32>
    tpu.vector_store %arg3[%c28, %c0_58], %222 {strides = array<i32>} : memref<128x128xf32, #tpu.memory_space<vmem>>, vector<1x128xf32>,
    %224 = arith.mulf %14, %20 : vector<16x128xf32>
    %225 = vector.extract_strided_slice %224 {offsets = [0, 0], sizes = [8, 128], strides = [1, 1]} : vector<16x128xf32> to vector<8x128xf32>
    %226 = vector.extract_strided_slice %224 {offsets = [8, 0], sizes = [8, 128], strides = [1, 1]} : vector<16x128xf32> to vector<8x128xf32>
    %227 = arith.addf %225, %226 : vector<8x128xf32>
    %cst_59 = arith.constant dense<0.000000e+00> : vector<128xf32>
    %228 = vector.multi_reduction <add>, %227, %cst_59 [0] : vector<8x128xf32> to vector<128xf32>
    %229 = vector.shape_cast %228 : vector<128xf32> to vector<1x128xf32>
    %c29 = arith.constant 29 : index
    %c0_60 = arith.constant 0 : index
    %230 = vector.load %arg3[%c29, %c0_60] : memref<128x128xf32, #tpu.memory_space<vmem>>, vector<1x128xf32>
    tpu.vector_store %arg3[%c29, %c0_60], %229 {strides = array<i32>} : memref<128x128xf32, #tpu.memory_space<vmem>>, vector<1x128xf32>,
    %231 = arith.mulf %15, %16 : vector<16x128xf32>
    %232 = vector.extract_strided_slice %231 {offsets = [0, 0], sizes = [8, 128], strides = [1, 1]} : vector<16x128xf32> to vector<8x128xf32>
    %233 = vector.extract_strided_slice %231 {offsets = [8, 0], sizes = [8, 128], strides = [1, 1]} : vector<16x128xf32> to vector<8x128xf32>
    %234 = arith.addf %232, %233 : vector<8x128xf32>
    %cst_61 = arith.constant dense<0.000000e+00> : vector<128xf32>
    %235 = vector.multi_reduction <add>, %234, %cst_61 [0] : vector<8x128xf32> to vector<128xf32>
    %236 = vector.shape_cast %235 : vector<128xf32> to vector<1x128xf32>
    %c30 = arith.constant 30 : index
    %c0_62 = arith.constant 0 : index
    %237 = vector.load %arg3[%c30, %c0_62] : memref<128x128xf32, #tpu.memory_space<vmem>>, vector<1x128xf32>
    tpu.vector_store %arg3[%c30, %c0_62], %236 {strides = array<i32>} : memref<128x128xf32, #tpu.memory_space<vmem>>, vector<1x128xf32>,
    %238 = arith.mulf %15, %17 : vector<16x128xf32>
    %239 = vector.extract_strided_slice %238 {offsets = [0, 0], sizes = [8, 128], strides = [1, 1]} : vector<16x128xf32> to vector<8x128xf32>
    %240 = vector.extract_strided_slice %238 {offsets = [8, 0], sizes = [8, 128], strides = [1, 1]} : vector<16x128xf32> to vector<8x128xf32>
    %241 = arith.addf %239, %240 : vector<8x128xf32>
    %cst_63 = arith.constant dense<0.000000e+00> : vector<128xf32>
    %242 = vector.multi_reduction <add>, %241, %cst_63 [0] : vector<8x128xf32> to vector<128xf32>
    %243 = vector.shape_cast %242 : vector<128xf32> to vector<1x128xf32>
    %c31 = arith.constant 31 : index
    %c0_64 = arith.constant 0 : index
    %244 = vector.load %arg3[%c31, %c0_64] : memref<128x128xf32, #tpu.memory_space<vmem>>, vector<1x128xf32>
    tpu.vector_store %arg3[%c31, %c0_64], %243 {strides = array<i32>} : memref<128x128xf32, #tpu.memory_space<vmem>>, vector<1x128xf32>,
    %245 = arith.mulf %15, %18 : vector<16x128xf32>
    %246 = vector.extract_strided_slice %245 {offsets = [0, 0], sizes = [8, 128], strides = [1, 1]} : vector<16x128xf32> to vector<8x128xf32>
    %247 = vector.extract_strided_slice %245 {offsets = [8, 0], sizes = [8, 128], strides = [1, 1]} : vector<16x128xf32> to vector<8x128xf32>
    %248 = arith.addf %246, %247 : vector<8x128xf32>
    %cst_65 = arith.constant dense<0.000000e+00> : vector<128xf32>
    %249 = vector.multi_reduction <add>, %248, %cst_65 [0] : vector<8x128xf32> to vector<128xf32>
    %250 = vector.shape_cast %249 : vector<128xf32> to vector<1x128xf32>
    %c32 = arith.constant 32 : index
    %c0_66 = arith.constant 0 : index
    %251 = vector.load %arg3[%c32, %c0_66] : memref<128x128xf32, #tpu.memory_space<vmem>>, vector<1x128xf32>
    tpu.vector_store %arg3[%c32, %c0_66], %250 {strides = array<i32>} : memref<128x128xf32, #tpu.memory_space<vmem>>, vector<1x128xf32>,
    %252 = arith.mulf %15, %19 : vector<16x128xf32>
    %253 = vector.extract_strided_slice %252 {offsets = [0, 0], sizes = [8, 128], strides = [1, 1]} : vector<16x128xf32> to vector<8x128xf32>
    %254 = vector.extract_strided_slice %252 {offsets = [8, 0], sizes = [8, 128], strides = [1, 1]} : vector<16x128xf32> to vector<8x128xf32>
    %255 = arith.addf %253, %254 : vector<8x128xf32>
    %cst_67 = arith.constant dense<0.000000e+00> : vector<128xf32>
    %256 = vector.multi_reduction <add>, %255, %cst_67 [0] : vector<8x128xf32> to vector<128xf32>
    %257 = vector.shape_cast %256 : vector<128xf32> to vector<1x128xf32>
    %c33 = arith.constant 33 : index
    %c0_68 = arith.constant 0 : index
    %258 = vector.load %arg3[%c33, %c0_68] : memref<128x128xf32, #tpu.memory_space<vmem>>, vector<1x128xf32>
    tpu.vector_store %arg3[%c33, %c0_68], %257 {strides = array<i32>} : memref<128x128xf32, #tpu.memory_space<vmem>>, vector<1x128xf32>,
    %259 = arith.mulf %15, %20 : vector<16x128xf32>
    %260 = vector.extract_strided_slice %259 {offsets = [0, 0], sizes = [8, 128], strides = [1, 1]} : vector<16x128xf32> to vector<8x128xf32>
    %261 = vector.extract_strided_slice %259 {offsets = [8, 0], sizes = [8, 128], strides = [1, 1]} : vector<16x128xf32> to vector<8x128xf32>
    %262 = arith.addf %260, %261 : vector<8x128xf32>
    %cst_69 = arith.constant dense<0.000000e+00> : vector<128xf32>
    %263 = vector.multi_reduction <add>, %262, %cst_69 [0] : vector<8x128xf32> to vector<128xf32>
    %264 = vector.shape_cast %263 : vector<128xf32> to vector<1x128xf32>
    %c34 = arith.constant 34 : index
    %c0_70 = arith.constant 0 : index
    %265 = vector.load %arg3[%c34, %c0_70] : memref<128x128xf32, #tpu.memory_space<vmem>>, vector<1x128xf32>
    tpu.vector_store %arg3[%c34, %c0_70], %264 {strides = array<i32>} : memref<128x128xf32, #tpu.memory_space<vmem>>, vector<1x128xf32>,
    %266 = arith.mulf %16, %17 : vector<16x128xf32>
    %267 = vector.extract_strided_slice %266 {offsets = [0, 0], sizes = [8, 128], strides = [1, 1]} : vector<16x128xf32> to vector<8x128xf32>
    %268 = vector.extract_strided_slice %266 {offsets = [8, 0], sizes = [8, 128], strides = [1, 1]} : vector<16x128xf32> to vector<8x128xf32>
    %269 = arith.addf %267, %268 : vector<8x128xf32>
    %cst_71 = arith.constant dense<0.000000e+00> : vector<128xf32>
    %270 = vector.multi_reduction <add>, %269, %cst_71 [0] : vector<8x128xf32> to vector<128xf32>
    %271 = vector.shape_cast %270 : vector<128xf32> to vector<1x128xf32>
    %c35 = arith.constant 35 : index
    %c0_72 = arith.constant 0 : index
    %272 = vector.load %arg3[%c35, %c0_72] : memref<128x128xf32, #tpu.memory_space<vmem>>, vector<1x128xf32>
    tpu.vector_store %arg3[%c35, %c0_72], %271 {strides = array<i32>} : memref<128x128xf32, #tpu.memory_space<vmem>>, vector<1x128xf32>,
    %273 = arith.mulf %16, %18 : vector<16x128xf32>
    %274 = vector.extract_strided_slice %273 {offsets = [0, 0], sizes = [8, 128], strides = [1, 1]} : vector<16x128xf32> to vector<8x128xf32>
    %275 = vector.extract_strided_slice %273 {offsets = [8, 0], sizes = [8, 128], strides = [1, 1]} : vector<16x128xf32> to vector<8x128xf32>
    %276 = arith.addf %274, %275 : vector<8x128xf32>
    %cst_73 = arith.constant dense<0.000000e+00> : vector<128xf32>
    %277 = vector.multi_reduction <add>, %276, %cst_73 [0] : vector<8x128xf32> to vector<128xf32>
    %278 = vector.shape_cast %277 : vector<128xf32> to vector<1x128xf32>
    %c36 = arith.constant 36 : index
    %c0_74 = arith.constant 0 : index
    %279 = vector.load %arg3[%c36, %c0_74] : memref<128x128xf32, #tpu.memory_space<vmem>>, vector<1x128xf32>
    tpu.vector_store %arg3[%c36, %c0_74], %278 {strides = array<i32>} : memref<128x128xf32, #tpu.memory_space<vmem>>, vector<1x128xf32>,
    %280 = arith.mulf %16, %19 : vector<16x128xf32>
    %281 = vector.extract_strided_slice %280 {offsets = [0, 0], sizes = [8, 128], strides = [1, 1]} : vector<16x128xf32> to vector<8x128xf32>
    %282 = vector.extract_strided_slice %280 {offsets = [8, 0], sizes = [8, 128], strides = [1, 1]} : vector<16x128xf32> to vector<8x128xf32>
    %283 = arith.addf %281, %282 : vector<8x128xf32>
    %cst_75 = arith.constant dense<0.000000e+00> : vector<128xf32>
    %284 = vector.multi_reduction <add>, %283, %cst_75 [0] : vector<8x128xf32> to vector<128xf32>
    %285 = vector.shape_cast %284 : vector<128xf32> to vector<1x128xf32>
    %c37 = arith.constant 37 : index
    %c0_76 = arith.constant 0 : index
    %286 = vector.load %arg3[%c37, %c0_76] : memref<128x128xf32, #tpu.memory_space<vmem>>, vector<1x128xf32>
    tpu.vector_store %arg3[%c37, %c0_76], %285 {strides = array<i32>} : memref<128x128xf32, #tpu.memory_space<vmem>>, vector<1x128xf32>,
    %287 = arith.mulf %16, %20 : vector<16x128xf32>
    %288 = vector.extract_strided_slice %287 {offsets = [0, 0], sizes = [8, 128], strides = [1, 1]} : vector<16x128xf32> to vector<8x128xf32>
    %289 = vector.extract_strided_slice %287 {offsets = [8, 0], sizes = [8, 128], strides = [1, 1]} : vector<16x128xf32> to vector<8x128xf32>
    %290 = arith.addf %288, %289 : vector<8x128xf32>
    %cst_77 = arith.constant dense<0.000000e+00> : vector<128xf32>
    %291 = vector.multi_reduction <add>, %290, %cst_77 [0] : vector<8x128xf32> to vector<128xf32>
    %292 = vector.shape_cast %291 : vector<128xf32> to vector<1x128xf32>
    %c38 = arith.constant 38 : index
    %c0_78 = arith.constant 0 : index
    %293 = vector.load %arg3[%c38, %c0_78] : memref<128x128xf32, #tpu.memory_space<vmem>>, vector<1x128xf32>
    tpu.vector_store %arg3[%c38, %c0_78], %292 {strides = array<i32>} : memref<128x128xf32, #tpu.memory_space<vmem>>, vector<1x128xf32>,
    %294 = arith.mulf %17, %18 : vector<16x128xf32>
    %295 = vector.extract_strided_slice %294 {offsets = [0, 0], sizes = [8, 128], strides = [1, 1]} : vector<16x128xf32> to vector<8x128xf32>
    %296 = vector.extract_strided_slice %294 {offsets = [8, 0], sizes = [8, 128], strides = [1, 1]} : vector<16x128xf32> to vector<8x128xf32>
    %297 = arith.addf %295, %296 : vector<8x128xf32>
    %cst_79 = arith.constant dense<0.000000e+00> : vector<128xf32>
    %298 = vector.multi_reduction <add>, %297, %cst_79 [0] : vector<8x128xf32> to vector<128xf32>
    %299 = vector.shape_cast %298 : vector<128xf32> to vector<1x128xf32>
    %c39 = arith.constant 39 : index
    %c0_80 = arith.constant 0 : index
    %300 = vector.load %arg3[%c39, %c0_80] : memref<128x128xf32, #tpu.memory_space<vmem>>, vector<1x128xf32>
    tpu.vector_store %arg3[%c39, %c0_80], %299 {strides = array<i32>} : memref<128x128xf32, #tpu.memory_space<vmem>>, vector<1x128xf32>,
    %301 = arith.mulf %17, %19 : vector<16x128xf32>
    %302 = vector.extract_strided_slice %301 {offsets = [0, 0], sizes = [8, 128], strides = [1, 1]} : vector<16x128xf32> to vector<8x128xf32>
    %303 = vector.extract_strided_slice %301 {offsets = [8, 0], sizes = [8, 128], strides = [1, 1]} : vector<16x128xf32> to vector<8x128xf32>
    %304 = arith.addf %302, %303 : vector<8x128xf32>
    %cst_81 = arith.constant dense<0.000000e+00> : vector<128xf32>
    %305 = vector.multi_reduction <add>, %304, %cst_81 [0] : vector<8x128xf32> to vector<128xf32>
    %306 = vector.shape_cast %305 : vector<128xf32> to vector<1x128xf32>
    %c40 = arith.constant 40 : index
    %c0_82 = arith.constant 0 : index
    %307 = vector.load %arg3[%c40, %c0_82] : memref<128x128xf32, #tpu.memory_space<vmem>>, vector<1x128xf32>
    tpu.vector_store %arg3[%c40, %c0_82], %306 {strides = array<i32>} : memref<128x128xf32, #tpu.memory_space<vmem>>, vector<1x128xf32>,
    %308 = arith.mulf %17, %20 : vector<16x128xf32>
    %309 = vector.extract_strided_slice %308 {offsets = [0, 0], sizes = [8, 128], strides = [1, 1]} : vector<16x128xf32> to vector<8x128xf32>
    %310 = vector.extract_strided_slice %308 {offsets = [8, 0], sizes = [8, 128], strides = [1, 1]} : vector<16x128xf32> to vector<8x128xf32>
    %311 = arith.addf %309, %310 : vector<8x128xf32>
    %cst_83 = arith.constant dense<0.000000e+00> : vector<128xf32>
    %312 = vector.multi_reduction <add>, %311, %cst_83 [0] : vector<8x128xf32> to vector<128xf32>
    %313 = vector.shape_cast %312 : vector<128xf32> to vector<1x128xf32>
    %c41 = arith.constant 41 : index
    %c0_84 = arith.constant 0 : index
    %314 = vector.load %arg3[%c41, %c0_84] : memref<128x128xf32, #tpu.memory_space<vmem>>, vector<1x128xf32>
    tpu.vector_store %arg3[%c41, %c0_84], %313 {strides = array<i32>} : memref<128x128xf32, #tpu.memory_space<vmem>>, vector<1x128xf32>,
    %315 = arith.mulf %18, %19 : vector<16x128xf32>
    %316 = vector.extract_strided_slice %315 {offsets = [0, 0], sizes = [8, 128], strides = [1, 1]} : vector<16x128xf32> to vector<8x128xf32>
    %317 = vector.extract_strided_slice %315 {offsets = [8, 0], sizes = [8, 128], strides = [1, 1]} : vector<16x128xf32> to vector<8x128xf32>
    %318 = arith.addf %316, %317 : vector<8x128xf32>
    %cst_85 = arith.constant dense<0.000000e+00> : vector<128xf32>
    %319 = vector.multi_reduction <add>, %318, %cst_85 [0] : vector<8x128xf32> to vector<128xf32>
    %320 = vector.shape_cast %319 : vector<128xf32> to vector<1x128xf32>
    %c42 = arith.constant 42 : index
    %c0_86 = arith.constant 0 : index
    %321 = vector.load %arg3[%c42, %c0_86] : memref<128x128xf32, #tpu.memory_space<vmem>>, vector<1x128xf32>
    tpu.vector_store %arg3[%c42, %c0_86], %320 {strides = array<i32>} : memref<128x128xf32, #tpu.memory_space<vmem>>, vector<1x128xf32>,
    %322 = arith.mulf %18, %20 : vector<16x128xf32>
    %323 = vector.extract_strided_slice %322 {offsets = [0, 0], sizes = [8, 128], strides = [1, 1]} : vector<16x128xf32> to vector<8x128xf32>
    %324 = vector.extract_strided_slice %322 {offsets = [8, 0], sizes = [8, 128], strides = [1, 1]} : vector<16x128xf32> to vector<8x128xf32>
    %325 = arith.addf %323, %324 : vector<8x128xf32>
    %cst_87 = arith.constant dense<0.000000e+00> : vector<128xf32>
    %326 = vector.multi_reduction <add>, %325, %cst_87 [0] : vector<8x128xf32> to vector<128xf32>
    %327 = vector.shape_cast %326 : vector<128xf32> to vector<1x128xf32>
    %c43 = arith.constant 43 : index
    %c0_88 = arith.constant 0 : index
    %328 = vector.load %arg3[%c43, %c0_88] : memref<128x128xf32, #tpu.memory_space<vmem>>, vector<1x128xf32>
    tpu.vector_store %arg3[%c43, %c0_88], %327 {strides = array<i32>} : memref<128x128xf32, #tpu.memory_space<vmem>>, vector<1x128xf32>,
    %329 = arith.mulf %19, %20 : vector<16x128xf32>
    %330 = vector.extract_strided_slice %329 {offsets = [0, 0], sizes = [8, 128], strides = [1, 1]} : vector<16x128xf32> to vector<8x128xf32>
    %331 = vector.extract_strided_slice %329 {offsets = [8, 0], sizes = [8, 128], strides = [1, 1]} : vector<16x128xf32> to vector<8x128xf32>
    %332 = arith.addf %330, %331 : vector<8x128xf32>
    %cst_89 = arith.constant dense<0.000000e+00> : vector<128xf32>
    %333 = vector.multi_reduction <add>, %332, %cst_89 [0] : vector<8x128xf32> to vector<128xf32>
    %334 = vector.shape_cast %333 : vector<128xf32> to vector<1x128xf32>
    %c44 = arith.constant 44 : index
    %c0_90 = arith.constant 0 : index
    %335 = vector.load %arg3[%c44, %c0_90] : memref<128x128xf32, #tpu.memory_space<vmem>>, vector<1x128xf32>
    tpu.vector_store %arg3[%c44, %c0_90], %334 {strides = array<i32>} : memref<128x128xf32, #tpu.memory_space<vmem>>, vector<1x128xf32>,
    %c0_91 = arith.constant 0 : index
    %c0_92 = arith.constant 0 : index
    %336 = vector.load %arg3[%c0_91, %c0_92] : memref<128x128xf32, #tpu.memory_space<vmem>>, vector<128x128xf32>
    %337 = tpu.transpose %336, [1, 0] : vector<128x128xf32> -> vector<128x128xf32>
    %338 = vector.extract_strided_slice %337 {offsets = [0, 0], sizes = [128, 45], strides = [1, 1]} : vector<128x128xf32> to vector<128x45xf32>
    %339 = arith.index_cast %1 : i32 to index
    %c0_93 = arith.constant 0 : index
    %340 = vector.load %arg2[%339, %c0_93] : memref<128x45xf32, #tpu.memory_space<vmem>>, vector<128x45xf32>
    tpu.vector_store %arg2[%339, %c0_93], %338 {strides = array<i32>} : memref<128x45xf32, #tpu.memory_space<vmem>>, vector<128x45xf32>,
    %c1_i32 = arith.constant 1 : i32
    return
  }
  func.func @transform_0(%arg0: i32) -> (i32, i32) {
    %c0_i32 = arith.constant 0 : i32
    %c0_i32_0 = arith.constant 0 : i32
    return %arg0, %c0_i32 : i32, i32
  }
  func.func @transform_1(%arg0: i32) -> (i32, i32) {
    %c0_i32 = arith.constant 0 : i32
    %c0_i32_0 = arith.constant 0 : i32
    return %arg0, %c0_i32 : i32, i32
  }
}

</mosaic_0001>

<llo_original>
// kernel: tpu_custom_call.1
$region0: #{tpu_custom_call.1}
  #allocation0 [shape = 'u32[]', space=smem, size = 0x4, offset = 0x4, fixed_abs, tag = 'smem constant byte address 0x4 - core index']
  #allocation1 [shape = 'u32[144,128]{1,0:T(1,128)}', space=vmem, size = 0x12000, scoped, tag = 'internal scratch']
  #allocation2 [shape = 'f32[128,128]{1,0:T(8,128)}', space=vmem, size = 0x10000, scoped, tag = 'scratch operand']
  %s0 = inlined_call_operand.vmem [shape: f32[256,160], index: 0, kind: input, shape index: {}]
  %s1 = inlined_call_operand.vmem [shape: f32[256,45], index: 1, kind: output, shape index: {}]
  %s2 = sld [smem:[#allocation0]]
  $region37: #{tpu_custom_call.1} parent=0
    _
  %s4 = ssub.s32 1, %s2
  %s5 = scalar_select 0, %s4, %s2
  loop: start=0, step=1, limit=4
  $region2: #{tpu_custom_call.1} parent=0 // loop_pre_header
    _
  $region3: #{tpu_custom_call.1} parent=0 // loop_header
    %s7 = sphi 0, %s11
    %p8 = scmp.ge.s32.totalorder %s7, 4
    %s17 = sphi 0, %s19
    %s20 = sphi 0, %s17
    %s21 = sphi 0, %s20
    %s37 = sphi 0, %s21
    %s43 = sphi 0, %s45
    %s46 = sphi 0, %s43
    %s47 = sphi 0, %s46
    %s63 = sphi 0, %s47
  $region4: #{tpu_custom_call.1} parent=0 // loop_header_branch
    %10 = sbr.rel (%p8) target = $region8
  $region5: #{tpu_custom_call.1} parent=0 // loop_body
    %s12 = ssub.s32 %s7, 1
    %s13 = ssub.s32 %s7, 2
    %s14 = sadd.s32 %s7, 1
    %s15 = ssub.s32 %s7, %s14
    %p16 = scmp.eq.s32.totalorder %s15, 0
    %s18 = sadd.s32 %s17, 1
    %s19 = scalar_select %p16, %s17, %s18
    %p22 = pneg %p16
    %p23 = scmp.eq.s32.totalorder %s7, 1
    %p24 = por %p22, %p23
    %p25 = scmp.ne.s32.totalorder %s17, %s20
    %p26 = scmp.eq.s32.totalorder %s7, 0
    %p27 = por %p25, %p26
    %p28 = scmp.ne.s32.totalorder %s17, %s20
    %p29 = scmp.eq.s32.totalorder %s12, 1
    %p30 = por %p28, %p29
    %p31 = scmp.ne.s32.totalorder %s20, %s21
    %p32 = scmp.eq.s32.totalorder %s12, 0
    %p33 = por %p31, %p32
    %p34 = scmp.ne.s32.totalorder %s20, %s21
    %p35 = scmp.eq.s32.totalorder %s13, 1
    %p36 = por %p34, %p35
    %p38 = scmp.ne.s32.totalorder %s21, %s37
    %p39 = scmp.eq.s32.totalorder %s13, 0
    %p40 = por %p38, %p39
    %s41 = ssub.s32 %s7, %s14
    %p42 = scmp.eq.s32.totalorder %s41, 0
    %s44 = sadd.s32 %s43, 1
    %s45 = scalar_select %p42, %s43, %s44
    %p48 = pneg %p42
    %p49 = scmp.eq.s32.totalorder %s7, 1
    %p50 = por %p48, %p49
    %p51 = scmp.ne.s32.totalorder %s43, %s46
    %p52 = scmp.eq.s32.totalorder %s7, 0
    %p53 = por %p51, %p52
    %p54 = scmp.ne.s32.totalorder %s43, %s46
    %p55 = scmp.eq.s32.totalorder %s12, 1
    %p56 = por %p54, %p55
    %p57 = scmp.ne.s32.totalorder %s46, %s47
    %p58 = scmp.eq.s32.totalorder %s12, 0
    %p59 = por %p57, %p58
    %p60 = scmp.ne.s32.totalorder %s46, %s47
    %p61 = scmp.eq.s32.totalorder %s13, 1
    %p62 = por %p60, %p61
    %p64 = scmp.ne.s32.totalorder %s47, %s63
    %p65 = scmp.eq.s32.totalorder %s13, 0
    %p66 = por %p64, %p65
    %p67 = scmp.le.s32.totalorder 1, %s7
    %p68 = scmp.lt.s32.totalorder %s7, 3
    %p69 = pnand %p67, %p68
    %p70 = pneg %p69
    // Predicated region
    $region9: #{tpu_custom_call.1} parent=5 // pred_check
      _
    $region10: #{tpu_custom_call.1} parent=5 // pred_check_branch
      %72 = sbr.rel (%p69) target = $region12
    $region11: #{tpu_custom_call.1} parent=5 // pred_region
      %s73 = ssub.s32 %s7, 1
    $region12: #{tpu_custom_call.1} parent=5 // pred_fallthru
      _
    %p74 = scmp.lt.s32.totalorder %s7, 2
    // Predicated region
    $region13: #{tpu_custom_call.1} parent=5 // pred_check
      %p75 = pneg %p74
    $region14: #{tpu_custom_call.1} parent=5 // pred_check_branch
      %77 = sbr.rel (%p75) target = $region16
    $region15: #{tpu_custom_call.1} parent=5 // pred_region
      // Predicated region
      $region17: #{tpu_custom_call.1} parent=15 // pred_check
        %p78 = pneg %p27
      $region18: #{tpu_custom_call.1} parent=15 // pred_check_branch
        %80 = sbr.rel (%p78) target = $region20
      $region19: #{tpu_custom_call.1} parent=15 // pred_region
        %s81 = smul.u32 16, %s7
        %p82 = scmp.lt.s32.totalorder %s81, 31
        %s83 = scalar_select %p82, %s81, 31
        %s84 = smul.addr %s83, 2
        %s85 = smul.addr %s84, 8
        %s86 = scalar_lea.vmem %s0, %s85
        %s87 = smul.u32 16, %s7
      $region20: #{tpu_custom_call.1} parent=15 // pred_fallthru
        _
    $region16: #{tpu_custom_call.1} parent=5 // pred_fallthru
      _
    %p88 = scmp.le.s32.totalorder 1, %s7
    %p89 = scmp.lt.s32.totalorder %s7, 3
    %p90 = pnand %p88, %p89
    %p91 = pneg %p90
    // Predicated region
    $region21: #{tpu_custom_call.1} parent=5 // pred_check
      _
    $region22: #{tpu_custom_call.1} parent=5 // pred_check_branch
      %93 = sbr.rel (%p90) target = $region24
    $region23: #{tpu_custom_call.1} parent=5 // pred_region
      %s94 = ssub.s32 %s7, 1
      %s95 = smul.u32 16, %s12
      %p96 = scmp.lt.s32.totalorder %s95, 31
      %s97 = scalar_select %p96, %s95, 31
      %s98 = smul.addr %s97, 2
      %s99 = smul.addr %s98, 8
      %s100 = scalar_lea.vmem %s0, %s99
      %p101 = pneg %p33
      %p102 = pneg %p30
      %p103 = pneg %p59
      %p104 = pneg %p56
      %s105 = smul.u32 16, %s12
      %p106 = scmp.lt.s32.totalorder %s105, 31
      %s107 = scalar_select %p106, %s105, 31
      %s108 = smul.addr %s107, 8
      %s109 = scalar_lea.vmem %s1, %s108
      %s110 = smul.u32 16, %s12
      %p111 = scmp.lt.s32.totalorder %s110, 31
      %s112 = scalar_select %p111, %s110, 31
      %s113 = smul.addr %s112, 2
      %s114 = smul.addr %s113, 8
      %s115 = scalar_lea.vmem %s0, %s114
      %s116 = smul.u32 16, %s12
      %s117 = smul.u32 16, %s12
      %p118 = scmp.lt.s32.totalorder %s117, 31
      %s119 = scalar_select %p118, %s117, 31
      %s120 = smul.addr %s119, 8
      %s121 = scalar_lea.vmem %s1, %s120
      %s122 = smul.u32 16, %s12
      %s123 = smul.u32 0, 2
      %s124 = smul.addr %s123, 8
      %s125 = scalar_lea.vmem %s115, %s124
      %v126 = vld [vmem:[%s125] sm:$0xff]
      %v127 = vld [vmem:[%s125 + $0x8] sm:$0xff]
      %v128 = vld [vmem:[%s125 + $0x10] sm:$0xff]
      %v129 = vld [vmem:[%s125 + $0x18] sm:$0xff]
      %v130 = vld [vmem:[%s125 + $0x20] sm:$0xff]
      %v131 = vld [vmem:[%s125 + $0x28] sm:$0xff]
      %v132 = vld [vmem:[%s125 + $0x30] sm:$0xff]
      %v133 = vld [vmem:[%s125 + $0x38] sm:$0xff]
      %v134 = vld [vmem:[%s125 + $0x40] sm:$0xff]
      %v135 = vld [vmem:[%s125 + $0x48] sm:$0xff]
      %v136 = vld [vmem:[%s125 + $0x50] sm:$0xff]
      %v137 = vld [vmem:[%s125 + $0x58] sm:$0xff]
      %v138 = vld [vmem:[%s125 + $0x60] sm:$0xff]
      %v139 = vld [vmem:[%s125 + $0x68] sm:$0xff]
      %v140 = vld [vmem:[%s125 + $0x70] sm:$0xff]
      %v141 = vld [vmem:[%s125 + $0x78] sm:$0xff]
      %v142 = vld [vmem:[%s125 + $0x80] sm:$0xff]
      %v143 = vld [vmem:[%s125 + $0x88] sm:$0xff]
      %v144 = vld [vmem:[%s125 + $0x90] sm:$0xff]
      %v145 = vld [vmem:[%s125 + $0x98] sm:$0xff]
      %v146 = vld [vmem:[%s125 + $0xa0] sm:$0xff]
      %v147 = vld [vmem:[%s125 + $0xa8] sm:$0xff]
      %v148 = vld [vmem:[%s125 + $0xb0] sm:$0xff]
      %v149 = vld [vmem:[%s125 + $0xb8] sm:$0xff]
      %v150 = vld [vmem:[%s125 + $0xc0] sm:$0xff]
      %v151 = vld [vmem:[%s125 + $0xc8] sm:$0xff]
      %v152 = vld [vmem:[%s125 + $0xd0] sm:$0xff]
      %v153 = vld [vmem:[%s125 + $0xd8] sm:$0xff]
      %v154 = vld [vmem:[%s125 + $0xe0] sm:$0xff]
      %v155 = vld [vmem:[%s125 + $0xe8] sm:$0xff]
      %v156 = vld [vmem:[%s125 + $0xf0] sm:$0xff]
      %v157 = vld [vmem:[%s125 + $0xf8] sm:$0xff]
      %vm158 = vcmask 261120
      %v159 = vsel %vm158, %v127, 0.0
      %v160 = vsel %vm158, %v129, 0.0
      %v161 = vsel %vm158, %v131, 0.0
      %v162 = vsel %vm158, %v133, 0.0
      %v163 = vsel %vm158, %v135, 0.0
      %v164 = vsel %vm158, %v137, 0.0
      %v165 = vsel %vm158, %v139, 0.0
      %v166 = vsel %vm158, %v141, 0.0
      %v167 = vsel %vm158, %v143, 0.0
      %v168 = vsel %vm158, %v145, 0.0
      %v169 = vsel %vm158, %v147, 0.0
      %v170 = vsel %vm158, %v149, 0.0
      %v171 = vsel %vm158, %v151, 0.0
      %v172 = vsel %vm158, %v153, 0.0
      %v173 = vsel %vm158, %v155, 0.0
      %v174 = vsel %vm158, %v157, 0.0
      %175 = vxpose.xlu0.b32.start [1/16] %v126, 128
      %176 = vxpose.xlu0.b32.cont [2/16] %v128, 128
      %177 = vxpose.xlu0.b32.cont [3/16] %v130, 128
      %178 = vxpose.xlu0.b32.cont [4/16] %v132, 128
      %179 = vxpose.xlu0.b32.cont [5/16] %v134, 128
      %180 = vxpose.xlu0.b32.cont [6/16] %v136, 128
      %181 = vxpose.xlu0.b32.cont [7/16] %v138, 128
      %182 = vxpose.xlu0.b32.cont [8/16] %v140, 128
      %183 = vxpose.xlu0.b32.cont [9/16] %v142, 128
      %184 = vxpose.xlu0.b32.cont [10/16] %v144, 128
      %185 = vxpose.xlu0.b32.cont [11/16] %v146, 128
      %186 = vxpose.xlu0.b32.cont [12/16] %v148, 128
      %187 = vxpose.xlu0.b32.cont [13/16] %v150, 128
      %188 = vxpose.xlu0.b32.cont [14/16] %v152, 128
      %189 = vxpose.xlu0.b32.cont [15/16] %v154, 128
      %190 = vxpose.xlu0.b32.end [16/16] %v156, 128
      %v191 = vpop.trf.xlu0
      %v192 = vpop.trf.xlu0
      %v193 = vpop.trf.xlu0
      %v194 = vpop.trf.xlu0
      %v195 = vpop.trf.xlu0
      %v196 = vpop.trf.xlu0
      %v197 = vpop.trf.xlu0
      %v198 = vpop.trf.xlu0
      %v199 = vpop.trf.xlu0
      %v200 = vpop.trf.xlu0
      %v201 = vpop.trf.xlu0
      %v202 = vpop.trf.xlu0
      %v203 = vpop.trf.xlu0
      %v204 = vpop.trf.xlu0
      %v205 = vpop.trf.xlu0
      %v206 = vpop.trf.xlu0
      %207 = vxpose.xlu0.b32.start [1/16] %v159, 128
      %208 = vxpose.xlu0.b32.cont [2/16] %v160, 128
      %209 = vxpose.xlu0.b32.cont [3/16] %v161, 128
      %210 = vxpose.xlu0.b32.cont [4/16] %v162, 128
      %211 = vxpose.xlu0.b32.cont [5/16] %v163, 128
      %212 = vxpose.xlu0.b32.cont [6/16] %v164, 128
      %213 = vxpose.xlu0.b32.cont [7/16] %v165, 128
      %214 = vxpose.xlu0.b32.cont [8/16] %v166, 128
      %215 = vxpose.xlu0.b32.cont [9/16] %v167, 128
      %216 = vxpose.xlu0.b32.cont [10/16] %v168, 128
      %217 = vxpose.xlu0.b32.cont [11/16] %v169, 128
      %218 = vxpose.xlu0.b32.cont [12/16] %v170, 128
      %219 = vxpose.xlu0.b32.cont [13/16] %v171, 128
      %220 = vxpose.xlu0.b32.cont [14/16] %v172, 128
      %221 = vxpose.xlu0.b32.cont [15/16] %v173, 128
      %222 = vxpose.xlu0.b32.end [16/16] %v174, 128
      %v223 = vpop.trf.xlu0
      %v224 = vpop.trf.xlu0
      %v225 = vpop.trf.xlu0
      %v226 = vpop.trf.xlu0
      %v227 = vpop.trf.xlu0
      %v228 = vpop.trf.xlu0
      %v229 = vpop.trf.xlu0
      %v230 = vpop.trf.xlu0
      %v231 = vpop.trf.xlu0
      %v232 = vpop.trf.xlu0
      %v233 = vpop.trf.xlu0
      %v234 = vpop.trf.xlu0
      %v235 = vpop.trf.xlu0
      %v236 = vpop.trf.xlu0
      %v237 = vpop.trf.xlu0
      %v238 = vpop.trf.xlu0
      %v239 = vmul.f32 %v191, %v193
      %v240 = vmul.f32 %v192, %v194
      %v241 = vadd.f32 %v239, %v240
      %v242 = vrot.slane %v241, 4
      %v243 = vadd.f32 %v241, %v242
      %v244 = vrot.slane %v243, 2
      %v245 = vadd.f32 %v243, %v244
      %v246 = vrot.slane %v245, 1
      %v247 = vadd.f32 %v245, %v246
      %248 = vst [vmem:[#allocation2] sm:$0x1] %v247
      %v249 = vmul.f32 %v191, %v195
      %v250 = vmul.f32 %v192, %v196
      %v251 = vadd.f32 %v249, %v250
      %v252 = vrot.slane %v251, 4
      %v253 = vadd.f32 %v251, %v252
      %v254 = vrot.slane %v253, 2
      %v255 = vadd.f32 %v253, %v254
      %v256 = vrot.slane %v255, 1
      %v257 = vadd.f32 %v255, %v256
      %258 = vst [vmem:[#allocation2 + $0x1] sm:$0x1] %v257
      %v259 = vmul.f32 %v191, %v197
      %v260 = vmul.f32 %v192, %v198
      %v261 = vadd.f32 %v259, %v260
      %v262 = vrot.slane %v261, 4
      %v263 = vadd.f32 %v261, %v262
      %v264 = vrot.slane %v263, 2
      %v265 = vadd.f32 %v263, %v264
      %v266 = vrot.slane %v265, 1
      %v267 = vadd.f32 %v265, %v266
      %268 = vst [vmem:[#allocation2 + $0x2] sm:$0x1] %v267
      %v269 = vmul.f32 %v191, %v199
      %v270 = vmul.f32 %v192, %v200
      %v271 = vadd.f32 %v269, %v270
      %v272 = vrot.slane %v271, 4
      %v273 = vadd.f32 %v271, %v272
      %v274 = vrot.slane %v273, 2
      %v275 = vadd.f32 %v273, %v274
      %v276 = vrot.slane %v275, 1
      %v277 = vadd.f32 %v275, %v276
      %278 = vst [vmem:[#allocation2 + $0x3] sm:$0x1] %v277
      %v279 = vmul.f32 %v191, %v201
      %v280 = vmul.f32 %v192, %v202
      %v281 = vadd.f32 %v279, %v280
      %v282 = vrot.slane %v281, 4
      %v283 = vadd.f32 %v281, %v282
      %v284 = vrot.slane %v283, 2
      %v285 = vadd.f32 %v283, %v284
      %v286 = vrot.slane %v285, 1
      %v287 = vadd.f32 %v285, %v286
      %288 = vst [vmem:[#allocation2 + $0x4] sm:$0x1] %v287
      %v289 = vmul.f32 %v191, %v203
      %v290 = vmul.f32 %v192, %v204
      %v291 = vadd.f32 %v289, %v290
      %v292 = vrot.slane %v291, 4
      %v293 = vadd.f32 %v291, %v292
      %v294 = vrot.slane %v293, 2
      %v295 = vadd.f32 %v293, %v294
      %v296 = vrot.slane %v295, 1
      %v297 = vadd.f32 %v295, %v296
      %298 = vst [vmem:[#allocation2 + $0x5] sm:$0x1] %v297
      %v299 = vmul.f32 %v191, %v205
      %v300 = vmul.f32 %v192, %v206
      %v301 = vadd.f32 %v299, %v300
      %v302 = vrot.slane %v301, 4
      %v303 = vadd.f32 %v301, %v302
      %v304 = vrot.slane %v303, 2
      %v305 = vadd.f32 %v303, %v304
      %v306 = vrot.slane %v305, 1
      %v307 = vadd.f32 %v305, %v306
      %308 = vst [vmem:[#allocation2 + $0x6] sm:$0x1] %v307
      %v309 = vmul.f32 %v191, %v223
      %v310 = vmul.f32 %v192, %v224
      %v311 = vadd.f32 %v309, %v310
      %v312 = vrot.slane %v311, 4
      %v313 = vadd.f32 %v311, %v312
      %v314 = vrot.slane %v313, 2
      %v315 = vadd.f32 %v313, %v314
      %v316 = vrot.slane %v315, 1
      %v317 = vadd.f32 %v315, %v316
      %318 = vst [vmem:[#allocation2 + $0x7] sm:$0x1] %v317
      %v319 = vmul.f32 %v191, %v225
      %v320 = vmul.f32 %v192, %v226
      %v321 = vadd.f32 %v319, %v320
      %v322 = vrot.slane %v321, 4
      %v323 = vadd.f32 %v321, %v322
      %v324 = vrot.slane %v323, 2
      %v325 = vadd.f32 %v323, %v324
      %v326 = vrot.slane %v325, 1
      %v327 = vadd.f32 %v325, %v326
      %328 = vst [vmem:[#allocation2 + $0x8] sm:$0x1] %v327
      %v329 = vmul.f32 %v193, %v195
      %v330 = vmul.f32 %v194, %v196
      %v331 = vadd.f32 %v329, %v330
      %v332 = vrot.slane %v331, 4
      %v333 = vadd.f32 %v331, %v332
      %v334 = vrot.slane %v333, 2
      %v335 = vadd.f32 %v333, %v334
      %v336 = vrot.slane %v335, 1
      %v337 = vadd.f32 %v335, %v336
      %338 = vst [vmem:[#allocation2 + $0x9] sm:$0x1] %v337
      %v339 = vmul.f32 %v193, %v197
      %v340 = vmul.f32 %v194, %v198
      %v341 = vadd.f32 %v339, %v340
      %v342 = vrot.slane %v341, 4
      %v343 = vadd.f32 %v341, %v342
      %v344 = vrot.slane %v343, 2
      %v345 = vadd.f32 %v343, %v344
      %v346 = vrot.slane %v345, 1
      %v347 = vadd.f32 %v345, %v346
      %348 = vst [vmem:[#allocation2 + $0xa] sm:$0x1] %v347
      %v349 = vmul.f32 %v193, %v199
      %v350 = vmul.f32 %v194, %v200
      %v351 = vadd.f32 %v349, %v350
      %v352 = vrot.slane %v351, 4
      %v353 = vadd.f32 %v351, %v352
      %v354 = vrot.slane %v353, 2
      %v355 = vadd.f32 %v353, %v354
      %v356 = vrot.slane %v355, 1
      %v357 = vadd.f32 %v355, %v356
      %358 = vst [vmem:[#allocation2 + $0xb] sm:$0x1] %v357
      %v359 = vmul.f32 %v193, %v201
      %v360 = vmul.f32 %v194, %v202
      %v361 = vadd.f32 %v359, %v360
      %v362 = vrot.slane %v361, 4
      %v363 = vadd.f32 %v361, %v362
      %v364 = vrot.slane %v363, 2
      %v365 = vadd.f32 %v363, %v364
      %v366 = vrot.slane %v365, 1
      %v367 = vadd.f32 %v365, %v366
      %368 = vst [vmem:[#allocation2 + $0xc] sm:$0x1] %v367
      %v369 = vmul.f32 %v193, %v203
      %v370 = vmul.f32 %v194, %v204
      %v371 = vadd.f32 %v369, %v370
      %v372 = vrot.slane %v371, 4
      %v373 = vadd.f32 %v371, %v372
      %v374 = vrot.slane %v373, 2
      %v375 = vadd.f32 %v373, %v374
      %v376 = vrot.slane %v375, 1
      %v377 = vadd.f32 %v375, %v376
      %378 = vst [vmem:[#allocation2 + $0xd] sm:$0x1] %v377
      %v379 = vmul.f32 %v193, %v205
      %v380 = vmul.f32 %v194, %v206
      %v381 = vadd.f32 %v379, %v380
      %v382 = vrot.slane %v381, 4
      %v383 = vadd.f32 %v381, %v382
      %v384 = vrot.slane %v383, 2
      %v385 = vadd.f32 %v383, %v384
      %v386 = vrot.slane %v385, 1
      %v387 = vadd.f32 %v385, %v386
      %388 = vst [vmem:[#allocation2 + $0xe] sm:$0x1] %v387
      %v389 = vmul.f32 %v193, %v223
      %v390 = vmul.f32 %v194, %v224
      %v391 = vadd.f32 %v389, %v390
      %v392 = vrot.slane %v391, 4
      %v393 = vadd.f32 %v391, %v392
      %v394 = vrot.slane %v393, 2
      %v395 = vadd.f32 %v393, %v394
      %v396 = vrot.slane %v395, 1
      %v397 = vadd.f32 %v395, %v396
      %398 = vst [vmem:[#allocation2 + $0xf] sm:$0x1] %v397
      %v399 = vmul.f32 %v193, %v225
      %v400 = vmul.f32 %v194, %v226
      %v401 = vadd.f32 %v399, %v400
      %v402 = vrot.slane %v401, 4
      %v403 = vadd.f32 %v401, %v402
      %v404 = vrot.slane %v403, 2
      %v405 = vadd.f32 %v403, %v404
      %v406 = vrot.slane %v405, 1
      %v407 = vadd.f32 %v405, %v406
      %408 = vst [vmem:[#allocation2 + $0x10] sm:$0x1] %v407
      %v409 = vmul.f32 %v195, %v197
      %v410 = vmul.f32 %v196, %v198
      %v411 = vadd.f32 %v409, %v410
      %v412 = vrot.slane %v411, 4
      %v413 = vadd.f32 %v411, %v412
      %v414 = vrot.slane %v413, 2
      %v415 = vadd.f32 %v413, %v414
      %v416 = vrot.slane %v415, 1
      %v417 = vadd.f32 %v415, %v416
      %418 = vst [vmem:[#allocation2 + $0x11] sm:$0x1] %v417
      %v419 = vmul.f32 %v195, %v199
      %v420 = vmul.f32 %v196, %v200
      %v421 = vadd.f32 %v419, %v420
      %v422 = vrot.slane %v421, 4
      %v423 = vadd.f32 %v421, %v422
      %v424 = vrot.slane %v423, 2
      %v425 = vadd.f32 %v423, %v424
      %v426 = vrot.slane %v425, 1
      %v427 = vadd.f32 %v425, %v426
      %428 = vst [vmem:[#allocation2 + $0x12] sm:$0x1] %v427
      %v429 = vmul.f32 %v195, %v201
      %v430 = vmul.f32 %v196, %v202
      %v431 = vadd.f32 %v429, %v430
      %v432 = vrot.slane %v431, 4
      %v433 = vadd.f32 %v431, %v432
      %v434 = vrot.slane %v433, 2
      %v435 = vadd.f32 %v433, %v434
      %v436 = vrot.slane %v435, 1
      %v437 = vadd.f32 %v435, %v436
      %438 = vst [vmem:[#allocation2 + $0x13] sm:$0x1] %v437
      %v439 = vmul.f32 %v195, %v203
      %v440 = vmul.f32 %v196, %v204
      %v441 = vadd.f32 %v439, %v440
      %v442 = vrot.slane %v441, 4
      %v443 = vadd.f32 %v441, %v442
      %v444 = vrot.slane %v443, 2
      %v445 = vadd.f32 %v443, %v444
      %v446 = vrot.slane %v445, 1
      %v447 = vadd.f32 %v445, %v446
      %448 = vst [vmem:[#allocation2 + $0x14] sm:$0x1] %v447
      %v449 = vmul.f32 %v195, %v205
      %v450 = vmul.f32 %v196, %v206
      %v451 = vadd.f32 %v449, %v450
      %v452 = vrot.slane %v451, 4
      %v453 = vadd.f32 %v451, %v452
      %v454 = vrot.slane %v453, 2
      %v455 = vadd.f32 %v453, %v454
      %v456 = vrot.slane %v455, 1
      %v457 = vadd.f32 %v455, %v456
      %458 = vst [vmem:[#allocation2 + $0x15] sm:$0x1] %v457
      %v459 = vmul.f32 %v195, %v223
      %v460 = vmul.f32 %v196, %v224
      %v461 = vadd.f32 %v459, %v460
      %v462 = vrot.slane %v461, 4
      %v463 = vadd.f32 %v461, %v462
      %v464 = vrot.slane %v463, 2
      %v465 = vadd.f32 %v463, %v464
      %v466 = vrot.slane %v465, 1
      %v467 = vadd.f32 %v465, %v466
      %468 = vst [vmem:[#allocation2 + $0x16] sm:$0x1] %v467
      %v469 = vmul.f32 %v195, %v225
      %v470 = vmul.f32 %v196, %v226
      %v471 = vadd.f32 %v469, %v470
      %v472 = vrot.slane %v471, 4
      %v473 = vadd.f32 %v471, %v472
      %v474 = vrot.slane %v473, 2
      %v475 = vadd.f32 %v473, %v474
      %v476 = vrot.slane %v475, 1
      %v477 = vadd.f32 %v475, %v476
      %478 = vst [vmem:[#allocation2 + $0x17] sm:$0x1] %v477
      %v479 = vmul.f32 %v197, %v199
      %v480 = vmul.f32 %v198, %v200
      %v481 = vadd.f32 %v479, %v480
      %v482 = vrot.slane %v481, 4
      %v483 = vadd.f32 %v481, %v482
      %v484 = vrot.slane %v483, 2
      %v485 = vadd.f32 %v483, %v484
      %v486 = vrot.slane %v485, 1
      %v487 = vadd.f32 %v485, %v486
      %488 = vst [vmem:[#allocation2 + $0x18] sm:$0x1] %v487
      %v489 = vmul.f32 %v197, %v201
      %v490 = vmul.f32 %v198, %v202
      %v491 = vadd.f32 %v489, %v490
      %v492 = vrot.slane %v491, 4
      %v493 = vadd.f32 %v491, %v492
      %v494 = vrot.slane %v493, 2
      %v495 = vadd.f32 %v493, %v494
      %v496 = vrot.slane %v495, 1
      %v497 = vadd.f32 %v495, %v496
      %498 = vst [vmem:[#allocation2 + $0x19] sm:$0x1] %v497
      %v499 = vmul.f32 %v197, %v203
      %v500 = vmul.f32 %v198, %v204
      %v501 = vadd.f32 %v499, %v500
      %v502 = vrot.slane %v501, 4
      %v503 = vadd.f32 %v501, %v502
      %v504 = vrot.slane %v503, 2
      %v505 = vadd.f32 %v503, %v504
      %v506 = vrot.slane %v505, 1
      %v507 = vadd.f32 %v505, %v506
      %508 = vst [vmem:[#allocation2 + $0x1a] sm:$0x1] %v507
      %v509 = vmul.f32 %v197, %v205
      %v510 = vmul.f32 %v198, %v206
      %v511 = vadd.f32 %v509, %v510
      %v512 = vrot.slane %v511, 4
      %v513 = vadd.f32 %v511, %v512
      %v514 = vrot.slane %v513, 2
      %v515 = vadd.f32 %v513, %v514
      %v516 = vrot.slane %v515, 1
      %v517 = vadd.f32 %v515, %v516
      %518 = vst [vmem:[#allocation2 + $0x1b] sm:$0x1] %v517
      %v519 = vmul.f32 %v197, %v223
      %v520 = vmul.f32 %v198, %v224
      %v521 = vadd.f32 %v519, %v520
      %v522 = vrot.slane %v521, 4
      %v523 = vadd.f32 %v521, %v522
      %v524 = vrot.slane %v523, 2
      %v525 = vadd.f32 %v523, %v524
      %v526 = vrot.slane %v525, 1
      %v527 = vadd.f32 %v525, %v526
      %528 = vst [vmem:[#allocation2 + $0x1c] sm:$0x1] %v527
      %v529 = vmul.f32 %v197, %v225
      %v530 = vmul.f32 %v198, %v226
      %v531 = vadd.f32 %v529, %v530
      %v532 = vrot.slane %v531, 4
      %v533 = vadd.f32 %v531, %v532
      %v534 = vrot.slane %v533, 2
      %v535 = vadd.f32 %v533, %v534
      %v536 = vrot.slane %v535, 1
      %v537 = vadd.f32 %v535, %v536
      %538 = vst [vmem:[#allocation2 + $0x1d] sm:$0x1] %v537
      %v539 = vmul.f32 %v199, %v201
      %v540 = vmul.f32 %v200, %v202
      %v541 = vadd.f32 %v539, %v540
      %v542 = vrot.slane %v541, 4
      %v543 = vadd.f32 %v541, %v542
      %v544 = vrot.slane %v543, 2
      %v545 = vadd.f32 %v543, %v544
      %v546 = vrot.slane %v545, 1
      %v547 = vadd.f32 %v545, %v546
      %548 = vst [vmem:[#allocation2 + $0x1e] sm:$0x1] %v547
      %v549 = vmul.f32 %v199, %v203
      %v550 = vmul.f32 %v200, %v204
      %v551 = vadd.f32 %v549, %v550
      %v552 = vrot.slane %v551, 4
      %v553 = vadd.f32 %v551, %v552
      %v554 = vrot.slane %v553, 2
      %v555 = vadd.f32 %v553, %v554
      %v556 = vrot.slane %v555, 1
      %v557 = vadd.f32 %v555, %v556
      %558 = vst [vmem:[#allocation2 + $0x1f] sm:$0x1] %v557
      %v559 = vmul.f32 %v199, %v205
      %v560 = vmul.f32 %v200, %v206
      %v561 = vadd.f32 %v559, %v560
      %v562 = vrot.slane %v561, 4
      %v563 = vadd.f32 %v561, %v562
      %v564 = vrot.slane %v563, 2
      %v565 = vadd.f32 %v563, %v564
      %v566 = vrot.slane %v565, 1
      %v567 = vadd.f32 %v565, %v566
      %568 = vst [vmem:[#allocation2 + $0x20] sm:$0x1] %v567
      %v569 = vmul.f32 %v199, %v223
      %v570 = vmul.f32 %v200, %v224
      %v571 = vadd.f32 %v569, %v570
      %v572 = vrot.slane %v571, 4
      %v573 = vadd.f32 %v571, %v572
      %v574 = vrot.slane %v573, 2
      %v575 = vadd.f32 %v573, %v574
      %v576 = vrot.slane %v575, 1
      %v577 = vadd.f32 %v575, %v576
      %578 = vst [vmem:[#allocation2 + $0x21] sm:$0x1] %v577
      %v579 = vmul.f32 %v199, %v225
      %v580 = vmul.f32 %v200, %v226
      %v581 = vadd.f32 %v579, %v580
      %v582 = vrot.slane %v581, 4
      %v583 = vadd.f32 %v581, %v582
      %v584 = vrot.slane %v583, 2
      %v585 = vadd.f32 %v583, %v584
      %v586 = vrot.slane %v585, 1
      %v587 = vadd.f32 %v585, %v586
      %588 = vst [vmem:[#allocation2 + $0x22] sm:$0x1] %v587
      %v589 = vmul.f32 %v201, %v203
      %v590 = vmul.f32 %v202, %v204
      %v591 = vadd.f32 %v589, %v590
      %v592 = vrot.slane %v591, 4
      %v593 = vadd.f32 %v591, %v592
      %v594 = vrot.slane %v593, 2
      %v595 = vadd.f32 %v593, %v594
      %v596 = vrot.slane %v595, 1
      %v597 = vadd.f32 %v595, %v596
      %598 = vst [vmem:[#allocation2 + $0x23] sm:$0x1] %v597
      %v599 = vmul.f32 %v201, %v205
      %v600 = vmul.f32 %v202, %v206
      %v601 = vadd.f32 %v599, %v600
      %v602 = vrot.slane %v601, 4
      %v603 = vadd.f32 %v601, %v602
      %v604 = vrot.slane %v603, 2
      %v605 = vadd.f32 %v603, %v604
      %v606 = vrot.slane %v605, 1
      %v607 = vadd.f32 %v605, %v606
      %608 = vst [vmem:[#allocation2 + $0x24] sm:$0x1] %v607
      %v609 = vmul.f32 %v201, %v223
      %v610 = vmul.f32 %v202, %v224
      %v611 = vadd.f32 %v609, %v610
      %v612 = vrot.slane %v611, 4
      %v613 = vadd.f32 %v611, %v612
      %v614 = vrot.slane %v613, 2
      %v615 = vadd.f32 %v613, %v614
      %v616 = vrot.slane %v615, 1
      %v617 = vadd.f32 %v615, %v616
      %618 = vst [vmem:[#allocation2 + $0x25] sm:$0x1] %v617
      %v619 = vmul.f32 %v201, %v225
      %v620 = vmul.f32 %v202, %v226
      %v621 = vadd.f32 %v619, %v620
      %v622 = vrot.slane %v621, 4
      %v623 = vadd.f32 %v621, %v622
      %v624 = vrot.slane %v623, 2
      %v625 = vadd.f32 %v623, %v624
      %v626 = vrot.slane %v625, 1
      %v627 = vadd.f32 %v625, %v626
      %628 = vst [vmem:[#allocation2 + $0x26] sm:$0x1] %v627
      %v629 = vmul.f32 %v203, %v205
      %v630 = vmul.f32 %v204, %v206
      %v631 = vadd.f32 %v629, %v630
      %v632 = vrot.slane %v631, 4
      %v633 = vadd.f32 %v631, %v632
      %v634 = vrot.slane %v633, 2
      %v635 = vadd.f32 %v633, %v634
      %v636 = vrot.slane %v635, 1
      %v637 = vadd.f32 %v635, %v636
      %638 = vst [vmem:[#allocation2 + $0x27] sm:$0x1] %v637
      %v639 = vmul.f32 %v203, %v223
      %v640 = vmul.f32 %v204, %v224
      %v641 = vadd.f32 %v639, %v640
      %v642 = vrot.slane %v641, 4
      %v643 = vadd.f32 %v641, %v642
      %v644 = vrot.slane %v643, 2
      %v645 = vadd.f32 %v643, %v644
      %v646 = vrot.slane %v645, 1
      %v647 = vadd.f32 %v645, %v646
      %648 = vst [vmem:[#allocation2 + $0x28] sm:$0x1] %v647
      %v649 = vmul.f32 %v203, %v225
      %v650 = vmul.f32 %v204, %v226
      %v651 = vadd.f32 %v649, %v650
      %v652 = vrot.slane %v651, 4
      %v653 = vadd.f32 %v651, %v652
      %v654 = vrot.slane %v653, 2
      %v655 = vadd.f32 %v653, %v654
      %v656 = vrot.slane %v655, 1
      %v657 = vadd.f32 %v655, %v656
      %658 = vst [vmem:[#allocation2 + $0x29] sm:$0x1] %v657
      %v659 = vmul.f32 %v205, %v223
      %v660 = vmul.f32 %v206, %v224
      %v661 = vadd.f32 %v659, %v660
      %v662 = vrot.slane %v661, 4
      %v663 = vadd.f32 %v661, %v662
      %v664 = vrot.slane %v663, 2
      %v665 = vadd.f32 %v663, %v664
      %v666 = vrot.slane %v665, 1
      %v667 = vadd.f32 %v665, %v666
      %668 = vst [vmem:[#allocation2 + $0x2a] sm:$0x1] %v667
      %v669 = vmul.f32 %v205, %v225
      %v670 = vmul.f32 %v206, %v226
      %v671 = vadd.f32 %v669, %v670
      %v672 = vrot.slane %v671, 4
      %v673 = vadd.f32 %v671, %v672
      %v674 = vrot.slane %v673, 2
      %v675 = vadd.f32 %v673, %v674
      %v676 = vrot.slane %v675, 1
      %v677 = vadd.f32 %v675, %v676
      %678 = vst [vmem:[#allocation2 + $0x2b] sm:$0x1] %v677
      %v679 = vmul.f32 %v223, %v225
      %v680 = vmul.f32 %v224, %v226
      %v681 = vadd.f32 %v679, %v680
      %v682 = vrot.slane %v681, 4
      %v683 = vadd.f32 %v681, %v682
      %v684 = vrot.slane %v683, 2
      %v685 = vadd.f32 %v683, %v684
      %v686 = vrot.slane %v685, 1
      %v687 = vadd.f32 %v685, %v686
      %688 = vst [vmem:[#allocation2 + $0x2c] sm:$0x1] %v687
      %v689 = vld [vmem:[#allocation2] sm:$0xff]
      %v690 = vld [vmem:[#allocation2 + $0x8] sm:$0xff]
      %v691 = vld [vmem:[#allocation2 + $0x10] sm:$0xff]
      %v692 = vld [vmem:[#allocation2 + $0x18] sm:$0xff]
      %v693 = vld [vmem:[#allocation2 + $0x20] sm:$0xff]
      %v694 = vld [vmem:[#allocation2 + $0x28] sm:$0xff]
      %v695 = vld [vmem:[#allocation2 + $0x30] sm:$0xff]
      %v696 = vld [vmem:[#allocation2 + $0x38] sm:$0xff]
      %v697 = vld [vmem:[#allocation2 + $0x40] sm:$0xff]
      %v698 = vld [vmem:[#allocation2 + $0x48] sm:$0xff]
      %v699 = vld [vmem:[#allocation2 + $0x50] sm:$0xff]
      %v700 = vld [vmem:[#allocation2 + $0x58] sm:$0xff]
      %v701 = vld [vmem:[#allocation2 + $0x60] sm:$0xff]
      %v702 = vld [vmem:[#allocation2 + $0x68] sm:$0xff]
      %v703 = vld [vmem:[#allocation2 + $0x70] sm:$0xff]
      %v704 = vld [vmem:[#allocation2 + $0x78] sm:$0xff]
      %705 = vxpose.xlu0.b32.start [1/16] %v689, 128
      %706 = vxpose.xlu0.b32.cont [2/16] %v690, 128
      %707 = vxpose.xlu0.b32.cont [3/16] %v691, 128
      %708 = vxpose.xlu0.b32.cont [4/16] %v692, 128
      %709 = vxpose.xlu0.b32.cont [5/16] %v693, 128
      %710 = vxpose.xlu0.b32.cont [6/16] %v694, 128
      %711 = vxpose.xlu0.b32.cont [7/16] %v695, 128
      %712 = vxpose.xlu0.b32.cont [8/16] %v696, 128
      %713 = vxpose.xlu0.b32.cont [9/16] %v697, 128
      %714 = vxpose.xlu0.b32.cont [10/16] %v698, 128
      %715 = vxpose.xlu0.b32.cont [11/16] %v699, 128
      %716 = vxpose.xlu0.b32.cont [12/16] %v700, 128
      %717 = vxpose.xlu0.b32.cont [13/16] %v701, 128
      %718 = vxpose.xlu0.b32.cont [14/16] %v702, 128
      %719 = vxpose.xlu0.b32.cont [15/16] %v703, 128
      %720 = vxpose.xlu0.b32.end [16/16] %v704, 128
      %v721 = vpop.trf.xlu0
      %v722 = vpop.trf.xlu0
      %v723 = vpop.trf.xlu0
      %v724 = vpop.trf.xlu0
      %v725 = vpop.trf.xlu0
      %v726 = vpop.trf.xlu0
      %v727 = vpop.trf.xlu0
      %v728 = vpop.trf.xlu0
      %v729 = vpop.trf.xlu0
      %v730 = vpop.trf.xlu0
      %v731 = vpop.trf.xlu0
      %v732 = vpop.trf.xlu0
      %v733 = vpop.trf.xlu0
      %v734 = vpop.trf.xlu0
      %v735 = vpop.trf.xlu0
      %v736 = vpop.trf.xlu0
      %vm737 = vcmask 367616
      %738 = vst.msk [vmem:[%s121] sm:$0xff] %vm737, %v721
      %739 = vst.msk [vmem:[%s121 + $0x8] sm:$0xff] %vm737, %v722
      %740 = vst.msk [vmem:[%s121 + $0x10] sm:$0xff] %vm737, %v723
      %741 = vst.msk [vmem:[%s121 + $0x18] sm:$0xff] %vm737, %v724
      %742 = vst.msk [vmem:[%s121 + $0x20] sm:$0xff] %vm737, %v725
      %743 = vst.msk [vmem:[%s121 + $0x28] sm:$0xff] %vm737, %v726
      %744 = vst.msk [vmem:[%s121 + $0x30] sm:$0xff] %vm737, %v727
      %745 = vst.msk [vmem:[%s121 + $0x38] sm:$0xff] %vm737, %v728
      %746 = vst.msk [vmem:[%s121 + $0x40] sm:$0xff] %vm737, %v729
      %747 = vst.msk [vmem:[%s121 + $0x48] sm:$0xff] %vm737, %v730
      %748 = vst.msk [vmem:[%s121 + $0x50] sm:$0xff] %vm737, %v731
      %749 = vst.msk [vmem:[%s121 + $0x58] sm:$0xff] %vm737, %v732
      %750 = vst.msk [vmem:[%s121 + $0x60] sm:$0xff] %vm737, %v733
      %751 = vst.msk [vmem:[%s121 + $0x68] sm:$0xff] %vm737, %v734
      %752 = vst.msk [vmem:[%s121 + $0x70] sm:$0xff] %vm737, %v735
      %753 = vst.msk [vmem:[%s121 + $0x78] sm:$0xff] %vm737, %v736
      %s754 = smul.u32 16, %s12
      %p755 = scmp.lt.s32.totalorder %s754, 31
      %s756 = scalar_select %p755, %s754, 31
      %s757 = smul.addr %s756, 8
      %s758 = scalar_lea.vmem %s1, %s757
      // Predicated region
      $region25: #{tpu_custom_call.1} parent=23 // pred_check
        %p759 = pneg %p56
      $region26: #{tpu_custom_call.1} parent=23 // pred_check_branch
        %761 = sbr.rel (%p759) target = $region28
      $region27: #{tpu_custom_call.1} parent=23 // pred_region
        %s762 = smul.u32 16, %s12
      $region28: #{tpu_custom_call.1} parent=23 // pred_fallthru
        _
    $region24: #{tpu_custom_call.1} parent=5 // pred_fallthru
      _
    %p763 = scmp.le.s32.totalorder 2, %s7
    // Predicated region
    $region29: #{tpu_custom_call.1} parent=5 // pred_check
      %p764 = pneg %p763
    $region30: #{tpu_custom_call.1} parent=5 // pred_check_branch
      %766 = sbr.rel (%p764) target = $region32
    $region31: #{tpu_custom_call.1} parent=5 // pred_region
      %s767 = ssub.s32 %s7, 2
      // Predicated region
      $region33: #{tpu_custom_call.1} parent=31 // pred_check
        %p768 = pneg %p62
      $region34: #{tpu_custom_call.1} parent=31 // pred_check_branch
        %770 = sbr.rel (%p768) target = $region36
      $region35: #{tpu_custom_call.1} parent=31 // pred_region
        %s771 = smul.u32 16, %s13
        %p772 = scmp.lt.s32.totalorder %s771, 31
        %s773 = scalar_select %p772, %s771, 31
        %s774 = smul.addr %s773, 8
        %s775 = scalar_lea.vmem %s1, %s774
      $region36: #{tpu_custom_call.1} parent=31 // pred_fallthru
        _
    $region32: #{tpu_custom_call.1} parent=5 // pred_fallthru
      _
  $region6: #{tpu_custom_call.1} parent=0 // loop_footer
    %s11 = sadd.s32 1, %s7
  $region7: #{tpu_custom_call.1} parent=0 // loop_footer_branch
    %6 = sbr.rel target = $region3
  $region8: #{tpu_custom_call.1} parent=0 // loop_exit
    _

</llo_original>
